<compile_context>
chip_gen: v5e
topology: v5e:2x2
jax: 0.10.0
libtpu: 0.0.40
codegen_flags: <defaults>
</compile_context>

<pallas_src>
import functools

import jax
import jax.numpy as jnp
from jax import lax
from jax.experimental import pallas as pl
from jax.experimental.pallas import tpu as pltpu

_MiB = 1024 * 1024


def _round_up(x, m):
    return (x + m - 1) // m * m


def _cdiv(a, b):
    return (a + b - 1) // b


def _compiler_params(n_parallel, vmem_bytes):
    return pltpu.CompilerParams(
        dimension_semantics=("parallel",) * n_parallel,
        vmem_limit_bytes=int(min(64 * _MiB, max(32 * _MiB, vmem_bytes))),
    )


# ----------------------------- Pallas kernels -----------------------------

def _phase_gemm_kernel(w_ref, a_ref, o_ref):
    # w_ref: (Cout, K) bf16, a_ref: (K, tl) bf16 -> o_ref: (Cout, tl) f32
    o_ref[...] = jnp.dot(w_ref[...], a_ref[...],
                         preferred_element_type=jnp.float32)


def _apply_act(y, act):
    if act == "relu":
        return jnp.maximum(y, 0.0)
    if act == "leakyrelu":
        return jnp.where(y > 0.0, y, 0.2 * y)
    if act == "elu":
        return jnp.where(y > 0.0, y, jnp.exp(jnp.minimum(y, 0.0)) - 1.0)
    if act == "selu":
        alpha, scale = 1.6732632423543772, 1.0507009873554805
        return scale * jnp.where(y > 0.0, y,
                                 alpha * (jnp.exp(jnp.minimum(y, 0.0)) - 1.0))
    return y  # 'none'


def _row_stats_kernel(x_ref, sum_ref, ssq_ref, *, hw):
    # per-row sum / sum-of-squares over the valid hw lanes (padded lanes masked)
    x = x_ref[...]
    col = lax.broadcasted_iota(jnp.int32, x.shape, 1)
    m = (col < hw).astype(jnp.float32)
    xm = x * m
    sum_ref[...] = jnp.sum(xm, axis=-1, keepdims=True)
    ssq_ref[...] = jnp.sum(xm * x, axis=-1, keepdims=True)


def _scale_shift_act_kernel(x_ref, mu_ref, inv_ref, o_ref, *, act):
    y = (x_ref[...] - mu_ref[...]) * inv_ref[...]
    o_ref[...] = _apply_act(y, act)


def _instance_norm_act_kernel(x_ref, o_ref, *, hw, eps, act):
    # fused single-pass per-row (= per (n, c) instance) normalization
    x = x_ref[...]
    col = lax.broadcasted_iota(jnp.int32, x.shape, 1)
    mask = col < hw
    inv_hw = 1.0 / float(hw)
    xm = jnp.where(mask, x, 0.0)
    mean = jnp.sum(xm, axis=-1, keepdims=True) * inv_hw
    d = jnp.where(mask, x - mean, 0.0)
    var = jnp.sum(d * d, axis=-1, keepdims=True) * inv_hw  # biased, like PyTorch
    y = (x - mean) * lax.rsqrt(var + eps)
    o_ref[...] = _apply_act(y, act)


# ----------------------------- GEMM wrapper -----------------------------

def _phase_gemm(w2t, a):
    """(Cout, K) @ (N, K, L) -> (N, Cout, L); bf16 operands, f32 accumulation."""
    Cout, K = w2t.shape
    N, K2, L = a.shape
    assert K == K2
    Lp = _round_up(L, 128)
    tl = Lp
    for cand in (2048, 1024, 512, 256, 128):
        if Lp % cand == 0:
            tl = cand
            break
    if Lp != L:
        a = jnp.pad(a, ((0, 0), (0, 0), (0, Lp - L)))
    vmem = 2 * (Cout * K * 2 + K * tl * 2 + Cout * tl * 4) + 2 * _MiB
    out = pl.pallas_call(
        _phase_gemm_kernel,
        out_shape=jax.ShapeDtypeStruct((N, Cout, Lp), jnp.float32),
        grid=(N, Lp // tl),
        in_specs=[
            pl.BlockSpec((Cout, K), lambda n, j: (0, 0)),
            pl.BlockSpec((None, K, tl), lambda n, j: (n, 0, j)),
        ],
        out_specs=pl.BlockSpec((None, Cout, tl), lambda n, j: (n, 0, j)),
        compiler_params=_compiler_params(2, vmem),
    )(w2t, a)
    if Lp != L:
        out = out[:, :, :L]
    return out


# ------------------------ transposed convolution ------------------------

def conv_transpose2d(x, w_t, *, stride, pad, output_pad):
    """PyTorch-semantics ConvTranspose2d (bias=False), NCHW in/out.

    Sub-pixel decomposition: output pixels are grouped by phase
    r = (o + pad) mod stride; each phase only receives the kernel taps with
    k % stride == r, so every MAC hits real data (no zero-dilation waste).
    Each phase is lowered to one batched Pallas MXU GEMM.
    """
    N, Cin, H, W = x.shape
    Cin2, Cout, kh, kw = w_t.shape
    assert Cin == Cin2
    s = stride
    Ho = (H - 1) * s - 2 * pad + kh + output_pad
    Wo = (W - 1) * s - 2 * pad + kw + output_pad

    xb = x.astype(jnp.bfloat16)
    wb = w_t.astype(jnp.bfloat16)
    Py, Px = kh + s, kw + s                      # generous halo, sliced statically
    xp = jnp.pad(xb, ((0, 0), (0, 0), (Py, Py), (Px, Px)))

    out = jnp.zeros((N, Cout, Ho, Wo), jnp.float32)
    for ry in range(s):
        kys = [ky for ky in range(kh) if ky % s == ry]
        oy0 = (ry - pad) % s
        Ly = _cdiv(Ho - oy0, s) if Ho > oy0 else 0
        u0y = (oy0 + pad - ry) // s
        if not kys or Ly <= 0:
            continue
        for rx in range(s):
            kxs = [kx for kx in range(kw) if kx % s == rx]
            ox0 = (rx - pad) % s
            Lx = _cdiv(Wo - ox0, s) if Wo > ox0 else 0
            u0x = (ox0 + pad - rx) // s
            if not kxs or Lx <= 0:
                continue
            a_taps, w_taps = [], []
            for my, ky in enumerate(kys):
                ys = u0y - my + Py
                for mx, kx in enumerate(kxs):
                    xs = u0x - mx + Px
                    sl = xp[:, :, ys:ys + Ly, xs:xs + Lx]      # (N, Cin, Ly, Lx)
                    a_taps.append(sl.reshape(N, Cin, Ly * Lx))
                    w_taps.append(wb[:, :, ky, kx])            # (Cin, Cout)
            a = jnp.concatenate(a_taps, axis=1)                # (N, Cin*T, L)
            w2 = jnp.concatenate(w_taps, axis=0)               # (Cin*T, Cout)
            ph = _phase_gemm(w2.T, a).reshape(N, Cout, Ly, Lx)
            out = out.at[:, :, oy0::s, ox0::s].set(ph)
    return out


# --------------------------- norm + activation ---------------------------

def _pick_row_tile(rows, hwp):
    # biggest row tile (multiple of 8) whose f32 block stays within ~1 MiB
    for tr in (32, 16, 8):
        if tr * hwp * 4 <= 1 * _MiB:
            return tr
    return 8


def norm_act(y, *, norm_type, act, eps=1e-5):
    """BatchNorm2d (training stats, identity affine) / InstanceNorm2d / none,
    fused with the activation, on an (N*C, H*W) row-tiled view (NCHW, no
    transposes)."""
    N, C, H, W = y.shape
    rows, hw = N * C, H * W
    hwp = _round_up(hw, 128)
    tr = _pick_row_tile(rows, hwp)
    rp = _round_up(rows, tr)
    x2 = y.reshape(rows, hw)
    if (rp, hwp) != (rows, hw):
        x2 = jnp.pad(x2, ((0, rp - rows), (0, hwp - hw)))

    grid = (rp // tr,)
    row_spec = pl.BlockSpec((tr, hwp), lambda i: (i, 0))
    vec_spec = pl.BlockSpec((tr, 1), lambda i: (i, 0))
    vmem = 2 * (2 * tr * hwp * 4 + 3 * tr * 4) + 2 * _MiB

    if norm_type == "instancenorm":
        out = pl.pallas_call(
            functools.partial(_instance_norm_act_kernel, hw=hw, eps=eps, act=act),
            out_shape=jax.ShapeDtypeStruct((rp, hwp), jnp.float32),
            grid=grid, in_specs=[row_spec], out_specs=row_spec,
            compiler_params=_compiler_params(1, vmem),
        )(x2)
    else:
        if norm_type == "batchnorm":
            rsum, rssq = pl.pallas_call(
                functools.partial(_row_stats_kernel, hw=hw),
                out_shape=(jax.ShapeDtypeStruct((rp, 1), jnp.float32),
                           jax.ShapeDtypeStruct((rp, 1), jnp.float32)),
                grid=grid, in_specs=[row_spec],
                out_specs=(vec_spec, vec_spec),
                compiler_params=_compiler_params(1, vmem),
            )(x2)
            rsum = rsum[:rows, 0].reshape(N, C)
            rssq = rssq[:rows, 0].reshape(N, C)
            cnt = float(N * hw)
            mean_c = jnp.sum(rsum, axis=0) / cnt                   # (C,)
            var_c = jnp.sum(rssq, axis=0) / cnt - mean_c * mean_c  # biased var
            inv_c = lax.rsqrt(var_c + eps)
            mu = jnp.broadcast_to(mean_c[None, :], (N, C)).reshape(rows, 1)
            inv = jnp.broadcast_to(inv_c[None, :], (N, C)).reshape(rows, 1)
        else:  # no normalization (use_bn=False / spectralnorm fallback)
            mu = jnp.zeros((rows, 1), jnp.float32)
            inv = jnp.ones((rows, 1), jnp.float32)
        if rp != rows:
            mu = jnp.pad(mu, ((0, rp - rows), (0, 0)))
            inv = jnp.pad(inv, ((0, rp - rows), (0, 0)), constant_values=1.0)
        out = pl.pallas_call(
            functools.partial(_scale_shift_act_kernel, act=act),
            out_shape=jax.ShapeDtypeStruct((rp, hwp), jnp.float32),
            grid=grid, in_specs=[row_spec, vec_spec, vec_spec],
            out_specs=row_spec,
            compiler_params=_compiler_params(1, vmem),
        )(x2, mu, inv)

    if (rp, hwp) != (rows, hw):
        out = out[:rows, :hw]
    return out.reshape(N, C, H, W)


# ------------------------------- DeConvBlock -------------------------------

def deconv_block_forward(w, x, *, stride, pad=None, output_pad=0,
                         use_bn=True, norm_type="batchnorm",
                         activation_type="leakyrelu", eps=1e-5):
    """DeConvBlock.forward: ConvTranspose2d(bias=False) -> norm -> activation.

    w: (Cin, Cout, ks, ks) PyTorch ConvTranspose2d weight layout, x: NCHW f32.
    """
    ks = w.shape[2]
    if pad is None:
        pad = ks // 2 // stride
    y = conv_transpose2d(x, w, stride=stride, pad=pad, output_pad=output_pad)
    if use_bn and norm_type in ("batchnorm", "instancenorm"):
        nt = norm_type
    else:
        # TODO(synk): 'spectralnorm' reparametrizes the deconv weight (power
        # iteration on the weight matrix); weight preprocessing not implemented.
        nt = "none"
    act = activation_type if activation_type is not None else "none"
    return norm_act(y, norm_type=nt, act=act, eps=eps)


# ------------------------------ reference (XLA) ------------------------------

def reference_forward(w, x, *, stride, pad, output_pad, norm_type, act, eps=1e-5):
    # same bf16-operand / f32-accumulation numerics as the Pallas path
    wb = w.astype(jnp.bfloat16)
    xb = x.astype(jnp.bfloat16)
    kh, kw = w.shape[2], w.shape[3]
    w_conv = jnp.transpose(jnp.flip(wb, (2, 3)), (1, 0, 2, 3))  # (Cout,Cin,kh,kw)
    y = lax.conv_general_dilated(
        xb, w_conv, window_strides=(1, 1),
        padding=[(kh - 1 - pad, kh - 1 - pad + output_pad),
                 (kw - 1 - pad, kw - 1 - pad + output_pad)],
        lhs_dilation=(stride, stride), rhs_dilation=(1, 1),
        dimension_numbers=("NCHW", "OIHW", "NCHW"),
        preferred_element_type=jnp.float32)
    if norm_type == "batchnorm":
        m = jnp.mean(y, axis=(0, 2, 3), keepdims=True)
        v = jnp.mean((y - m) ** 2, axis=(0, 2, 3), keepdims=True)
        y = (y - m) * lax.rsqrt(v + eps)
    elif norm_type == "instancenorm":
        m = jnp.mean(y, axis=(2, 3), keepdims=True)
        v = jnp.mean((y - m) ** 2, axis=(2, 3), keepdims=True)
        y = (y - m) * lax.rsqrt(v + eps)
    return _apply_act(y, act)


if __name__ == "__main__":
    key = jax.random.PRNGKey(0)
    k1, k2, k3, k4 = jax.random.split(key, 4)

    # --- config 1: module defaults (batchnorm + leakyrelu), ks=4, stride=2 ---
    N, Cin, Cout, H, W = 2, 16, 32, 16, 16
    ks, stride = 4, 2                       # default pad = ks // 2 // stride = 1
    x = jax.random.normal(k1, (N, Cin, H, W), jnp.float32)
    w = 0.05 * jax.random.normal(k2, (Cin, Cout, ks, ks), jnp.float32)

    fwd = jax.jit(functools.partial(deconv_block_forward, stride=stride,
                                    norm_type="batchnorm",
                                    activation_type="leakyrelu"))
    y = jax.block_until_ready(fwd(w, x))
    assert y.shape == (N, Cout, 2 * H, 2 * W), y.shape
    assert bool(jnp.all(jnp.isfinite(y)))
    y_ref = reference_forward(w, x, stride=stride, pad=1, output_pad=0,
                              norm_type="batchnorm", act="leakyrelu")
    assert float(jnp.max(jnp.abs(y - y_ref))) < 5e-3

    # --- config 2: instancenorm path (fused single-pass norm kernel) ---
    fwd_in = jax.jit(functools.partial(deconv_block_forward, stride=stride,
                                       norm_type="instancenorm",
                                       activation_type="leakyrelu"))
    y2 = jax.block_until_ready(fwd_in(w, x))
    y2_ref = reference_forward(w, x, stride=stride, pad=1, output_pad=0,
                               norm_type="instancenorm", act="leakyrelu")
    assert float(jnp.max(jnp.abs(y2 - y2_ref))) < 5e-3

    # --- config 3: odd kernel + output_padding (ks=3, s=2, pad=1, out_pad=1) ---
    x3 = jax.random.normal(k3, (2, 8, 16, 16), jnp.float32)
    w3 = 0.05 * jax.random.normal(k4, (8, 16, 3, 3), jnp.float32)
    fwd3 = jax.jit(functools.partial(deconv_block_forward, stride=2, pad=1,
                                     output_pad=1, norm_type="instancenorm",
                                     activation_type="relu"))
    y3 = jax.block_until_ready(fwd3(w3, x3))
    assert y3.shape == (2, 16, 32, 32), y3.shape
    y3_ref = reference_forward(w3, x3, stride=2, pad=1, output_pad=1,
                               norm_type="instancenorm", act="relu")
    assert float(jnp.max(jnp.abs(y3 - y3_ref))) < 5e-3

    print("KERNEL_OK")
</pallas_src>

<mosaic_0001>
module attributes {stable_mosaic.version = 11 : i64} {
  func.func @_phase_gemm_kernel(%arg0: i32, %arg1: i32, %arg2: memref<32x64xbf16, #tpu.memory_space<vmem>>, %arg3: memref<1x64x256xbf16, #tpu.memory_space<vmem>>, %arg4: memref<1x32x256xf32, #tpu.memory_space<vmem>>) attributes {dimension_semantics = [#tpu.dimension_semantics<parallel>, #tpu.dimension_semantics<parallel>], iteration_bounds = array<i64: 2, 1>, scalar_prefetch = 0 : i64, scratch_operands = 0 : i64, tpu.core_type = #tpu.core_type<tc>, window_params = [{pipeline_mode = #tpu.pipeline_mode<synchronous>, transform_indices = @transform_0, window_bounds = array<i64: 32, 64>}, {transform_indices = @transform_1, window_bounds = array<i64: 1, 64, 256>}, {transform_indices = @transform_2, window_bounds = array<i64: 1, 32, 256>}]} {
    %c0 = arith.constant 0 : index
    %c0_0 = arith.constant 0 : index
    %0 = vector.load %arg2[%c0, %c0_0] : memref<32x64xbf16, #tpu.memory_space<vmem>>, vector<32x64xbf16>
    %c0_1 = arith.constant 0 : index
    %c0_2 = arith.constant 0 : index
    %c0_3 = arith.constant 0 : index
    %1 = vector.load %arg3[%c0_1, %c0_2, %c0_3] : memref<1x64x256xbf16, #tpu.memory_space<vmem>>, vector<1x64x256xbf16>
    %2 = vector.shape_cast %1 : vector<1x64x256xbf16> to vector<64x256xbf16>
    %cst = arith.constant dense<0.000000e+00> : vector<32x256xf32>
    %3 = tpu.matmul %0, %2, %cst {dimension_numbers = #tpu.dot_dimension_numbers<[1], [0], [0], [1], [0, 0, 1, 1], [], []>} : vector<32x64xbf16>, vector<64x256xbf16>, vector<32x256xf32> -> vector<32x256xf32>
    %c0_4 = arith.constant 0 : index
    %c0_5 = arith.constant 0 : index
    %c0_6 = arith.constant 0 : index
    %4 = vector.load %arg4[%c0_4, %c0_5, %c0_6] : memref<1x32x256xf32, #tpu.memory_space<vmem>>, vector<1x32x256xf32>
    %5 = vector.shape_cast %4 : vector<1x32x256xf32> to vector<32x256xf32>
    %6 = vector.shape_cast %3 : vector<32x256xf32> to vector<1x32x256xf32>
    tpu.vector_store %arg4[%c0_4, %c0_5, %c0_6], %6 {strides = array<i32>} : memref<1x32x256xf32, #tpu.memory_space<vmem>>, vector<1x32x256xf32>,
    return
  }
  func.func @transform_0(%arg0: i32, %arg1: i32) -> (i32, i32) {
    %c0_i32 = arith.constant 0 : i32
    %c0_i32_0 = arith.constant 0 : i32
    %c0_i32_1 = arith.constant 0 : i32
    return %c0_i32, %c0_i32_0 : i32, i32
  }
  func.func @transform_1(%arg0: i32, %arg1: i32) -> (i32, i32, i32) {
    %c0_i32 = arith.constant 0 : i32
    %c0_i32_0 = arith.constant 0 : i32
    return %arg0, %c0_i32, %arg1 : i32, i32, i32
  }
  func.func @transform_2(%arg0: i32, %arg1: i32) -> (i32, i32, i32) {
    %c0_i32 = arith.constant 0 : i32
    %c0_i32_0 = arith.constant 0 : i32
    return %arg0, %c0_i32, %arg1 : i32, i32, i32
  }
}

module attributes {stable_mosaic.version = 11 : i64} {
  func.func @_row_stats_kernel(%arg0: i32, %arg1: memref<32x1024xf32, #tpu.memory_space<vmem>>, %arg2: memref<32x1xf32, #tpu.memory_space<vmem>>, %arg3: memref<32x1xf32, #tpu.memory_space<vmem>>) attributes {dimension_semantics = [#tpu.dimension_semantics<parallel>], iteration_bounds = array<i64: 2>, scalar_prefetch = 0 : i64, scratch_operands = 0 : i64, tpu.core_type = #tpu.core_type<tc>, window_params = [{transform_indices = @transform_0, window_bounds = array<i64: 32, 1024>}, {transform_indices = @transform_1, window_bounds = array<i64: 32, 1>}, {transform_indices = @transform_2, window_bounds = array<i64: 32, 1>}]} {
    %c0 = arith.constant 0 : index
    %c0_0 = arith.constant 0 : index
    %0 = vector.load %arg1[%c0, %c0_0] : memref<32x1024xf32, #tpu.memory_space<vmem>>, vector<32x1024xf32>
    %1 = tpu.iota {dimensions = array<i32: 1>} : vector<32x1024xi32>
    %c1024_i32 = arith.constant 1024 : i32
    %2 = vector.broadcast %c1024_i32 : i32 to vector<32x1024xi32>
    %3 = arith.cmpi slt, %1, %2 : vector<32x1024xi32>
    %4 = arith.extui %3 : vector<32x1024xi1> to vector<32x1024xi32>
    %5 = arith.sitofp %4 : vector<32x1024xi32> to vector<32x1024xf32>
    %6 = arith.mulf %0, %5 : vector<32x1024xf32>
    %cst = arith.constant dense<0.000000e+00> : vector<32xf32>
    %7 = vector.multi_reduction <add>, %6, %cst [1] : vector<32x1024xf32> to vector<32xf32>
    %8 = vector.shape_cast %7 : vector<32xf32> to vector<32x1xf32>
    %c0_1 = arith.constant 0 : index
    %c0_2 = arith.constant 0 : index
    %9 = vector.load %arg2[%c0_1, %c0_2] : memref<32x1xf32, #tpu.memory_space<vmem>>, vector<32x1xf32>
    tpu.vector_store %arg2[%c0_1, %c0_2], %8 {strides = array<i32>} : memref<32x1xf32, #tpu.memory_space<vmem>>, vector<32x1xf32>,
    %10 = arith.mulf %6, %0 : vector<32x1024xf32>
    %cst_3 = arith.constant dense<0.000000e+00> : vector<32xf32>
    %11 = vector.multi_reduction <add>, %10, %cst_3 [1] : vector<32x1024xf32> to vector<32xf32>
    %12 = vector.shape_cast %11 : vector<32xf32> to vector<32x1xf32>
    %c0_4 = arith.constant 0 : index
    %c0_5 = arith.constant 0 : index
    %13 = vector.load %arg3[%c0_4, %c0_5] : memref<32x1xf32, #tpu.memory_space<vmem>>, vector<32x1xf32>
    tpu.vector_store %arg3[%c0_4, %c0_5], %12 {strides = array<i32>} : memref<32x1xf32, #tpu.memory_space<vmem>>, vector<32x1xf32>,
    return
  }
  func.func @transform_0(%arg0: i32) -> (i32, i32) {
    %c0_i32 = arith.constant 0 : i32
    %c0_i32_0 = arith.constant 0 : i32
    return %arg0, %c0_i32 : i32, i32
  }
  func.func @transform_1(%arg0: i32) -> (i32, i32) {
    %c0_i32 = arith.constant 0 : i32
    %c0_i32_0 = arith.constant 0 : i32
    return %arg0, %c0_i32 : i32, i32
  }
  func.func @transform_2(%arg0: i32) -> (i32, i32) {
    %c0_i32 = arith.constant 0 : i32
    %c0_i32_0 = arith.constant 0 : i32
    return %arg0, %c0_i32 : i32, i32
  }
}

module attributes {stable_mosaic.version = 11 : i64} {
  func.func @_scale_shift_act_kernel(%arg0: i32, %arg1: memref<32x1024xf32, #tpu.memory_space<vmem>>, %arg2: memref<32x1xf32, #tpu.memory_space<vmem>>, %arg3: memref<32x1xf32, #tpu.memory_space<vmem>>, %arg4: memref<32x1024xf32, #tpu.memory_space<vmem>>) attributes {dimension_semantics = [#tpu.dimension_semantics<parallel>], iteration_bounds = array<i64: 2>, scalar_prefetch = 0 : i64, scratch_operands = 0 : i64, tpu.core_type = #tpu.core_type<tc>, window_params = [{transform_indices = @transform_0, window_bounds = array<i64: 32, 1024>}, {transform_indices = @transform_1, window_bounds = array<i64: 32, 1>}, {transform_indices = @transform_2, window_bounds = array<i64: 32, 1>}, {transform_indices = @transform_3, window_bounds = array<i64: 32, 1024>}]} {
    %c0 = arith.constant 0 : index
    %c0_0 = arith.constant 0 : index
    %0 = vector.load %arg1[%c0, %c0_0] : memref<32x1024xf32, #tpu.memory_space<vmem>>, vector<32x1024xf32>
    %c0_1 = arith.constant 0 : index
    %c0_2 = arith.constant 0 : index
    %1 = vector.load %arg2[%c0_1, %c0_2] : memref<32x1xf32, #tpu.memory_space<vmem>>, vector<32x1xf32>
    %2 = vector.broadcast %1 : vector<32x1xf32> to vector<32x1024xf32>
    %3 = arith.subf %0, %2 : vector<32x1024xf32>
    %c0_3 = arith.constant 0 : index
    %c0_4 = arith.constant 0 : index
    %4 = vector.load %arg3[%c0_3, %c0_4] : memref<32x1xf32, #tpu.memory_space<vmem>>, vector<32x1xf32>
    %5 = vector.broadcast %4 : vector<32x1xf32> to vector<32x1024xf32>
    %6 = arith.mulf %3, %5 : vector<32x1024xf32>
    %cst = arith.constant 0.000000e+00 : f32
    %7 = vector.broadcast %cst : f32 to vector<32x1024xf32>
    %8 = arith.cmpf ogt, %6, %7 : vector<32x1024xf32>
    %cst_5 = arith.constant 2.000000e-01 : f32
    %9 = vector.broadcast %cst_5 : f32 to vector<32x1024xf32>
    %10 = arith.mulf %9, %6 : vector<32x1024xf32>
    %11 = arith.select %8, %6, %10 : vector<32x1024xi1>, vector<32x1024xf32>
    %c0_6 = arith.constant 0 : index
    %c0_7 = arith.constant 0 : index
    %12 = vector.load %arg4[%c0_6, %c0_7] : memref<32x1024xf32, #tpu.memory_space<vmem>>, vector<32x1024xf32>
    tpu.vector_store %arg4[%c0_6, %c0_7], %11 {strides = array<i32>} : memref<32x1024xf32, #tpu.memory_space<vmem>>, vector<32x1024xf32>,
    return
  }
  func.func @transform_0(%arg0: i32) -> (i32, i32) {
    %c0_i32 = arith.constant 0 : i32
    %c0_i32_0 = arith.constant 0 : i32
    return %arg0, %c0_i32 : i32, i32
  }
  func.func @transform_1(%arg0: i32) -> (i32, i32) {
    %c0_i32 = arith.constant 0 : i32
    %c0_i32_0 = arith.constant 0 : i32
    return %arg0, %c0_i32 : i32, i32
  }
  func.func @transform_2(%arg0: i32) -> (i32, i32) {
    %c0_i32 = arith.constant 0 : i32
    %c0_i32_0 = arith.constant 0 : i32
    return %arg0, %c0_i32 : i32, i32
  }
  func.func @transform_3(%arg0: i32) -> (i32, i32) {
    %c0_i32 = arith.constant 0 : i32
    %c0_i32_0 = arith.constant 0 : i32
    return %arg0, %c0_i32 : i32, i32
  }
}

</mosaic_0001>

<llo_original>
// kernel: deconv_block_forward.6
$region0: #{deconv_block_forward.6}
  #allocation0 [shape = 'u32[]', space=smem, size = 0x4, offset = 0x4, fixed_abs, tag = 'smem constant byte address 0x4 - core index']
  #allocation1 [shape = 'u32[72,128]{1,0:T(1,128)}', space=vmem, size = 0x9000, scoped, tag = 'internal scratch']
  %s0 = inlined_call_operand.vmem [shape: bf16[32,64], index: 0, kind: input, shape index: {}]
  %s1 = inlined_call_operand.vmem [shape: bf16[2,64,256], index: 1, kind: input, shape index: {}]
  %s2 = inlined_call_operand.vmem [shape: f32[2,32,256], index: 2, kind: output, shape index: {}]
  %s3 = sld [smem:[#allocation0]]
  $region41: #{deconv_block_forward.6} parent=0
    _
  %s5 = ssub.s32 1, %s3
  %s6 = scalar_select 0, %s5, %s3
  loop: start=0, step=1, limit=4
  $region2: #{deconv_block_forward.6} parent=0 // loop_pre_header
    _
  $region3: #{deconv_block_forward.6} parent=0 // loop_header
    %s8 = sphi 0, %s12
    %p9 = scmp.ge.s32.totalorder %s8, 4
    %s15 = sphi 0, %s27
    %s16 = sphi 0, %s23
    %s17 = sphi 0, %s15
    %s18 = sphi 0, %s16
    %s19 = sphi 0, %s17
    %s20 = sphi 0, %s18
    %s28 = sphi 0, %s28
    %s30 = sphi 0, %s28
    %s31 = sphi 0, %s30
    %s45 = sphi 0, %s31
    %s53 = sphi 0, %s55
    %s56 = sphi 0, %s53
    %s57 = sphi 0, %s56
    %s73 = sphi 0, %s57
    %s81 = sphi 0, %s83
    %s84 = sphi 0, %s81
    %s85 = sphi 0, %s84
    %s101 = sphi 0, %s85
  $region4: #{deconv_block_forward.6} parent=0 // loop_header_branch
    %11 = sbr.rel (%p9) target = $region8
  $region5: #{deconv_block_forward.6} parent=0 // loop_body
    %s13 = ssub.s32 %s8, 1
    %s14 = ssub.s32 %s8, 2
    %s21 = sadd.s32 1, %s16
    %p22 = scmp.ge.s32.totalorder %s21, 1
    %s23 = scalar_select %p22, 0, %s21
    %s24 = sadd.s32 1, %s15
    %s25 = scalar_select %p22, %s24, %s15
    %p26 = scmp.ge.s32.totalorder %s25, 2
    %s27 = scalar_select %p26, 0, %s25
    %s29 = sadd.s32 %s28, 1
    %p32 = scmp.eq.s32.totalorder %s8, 1
    %p33 = scmp.ne.s32.totalorder %s28, %s30
    %p34 = scmp.eq.s32.totalorder %s8, 0
    %p35 = por %p33, %p34
    %p36 = scmp.ne.s32.totalorder %s28, %s30
    %p37 = scmp.eq.s32.totalorder %s13, 1
    %p38 = por %p36, %p37
    %p39 = scmp.ne.s32.totalorder %s30, %s31
    %p40 = scmp.eq.s32.totalorder %s13, 0
    %p41 = por %p39, %p40
    %p42 = scmp.ne.s32.totalorder %s30, %s31
    %p43 = scmp.eq.s32.totalorder %s14, 1
    %p44 = por %p42, %p43
    %p46 = scmp.ne.s32.totalorder %s31, %s45
    %p47 = scmp.eq.s32.totalorder %s14, 0
    %p48 = por %p46, %p47
    %s49 = ssub.s32 %s15, %s27
    %s50 = ssub.s32 %s16, %s23
    %s51 = sor.u32 %s49, %s50
    %p52 = scmp.eq.s32.totalorder %s51, 0
    %s54 = sadd.s32 %s53, 1
    %s55 = scalar_select %p52, %s53, %s54
    %p58 = pneg %p52
    %p59 = scmp.eq.s32.totalorder %s8, 1
    %p60 = por %p58, %p59
    %p61 = scmp.ne.s32.totalorder %s53, %s56
    %p62 = scmp.eq.s32.totalorder %s8, 0
    %p63 = por %p61, %p62
    %p64 = scmp.ne.s32.totalorder %s53, %s56
    %p65 = scmp.eq.s32.totalorder %s13, 1
    %p66 = por %p64, %p65
    %p67 = scmp.ne.s32.totalorder %s56, %s57
    %p68 = scmp.eq.s32.totalorder %s13, 0
    %p69 = por %p67, %p68
    %p70 = scmp.ne.s32.totalorder %s56, %s57
    %p71 = scmp.eq.s32.totalorder %s14, 1
    %p72 = por %p70, %p71
    %p74 = scmp.ne.s32.totalorder %s57, %s73
    %p75 = scmp.eq.s32.totalorder %s14, 0
    %p76 = por %p74, %p75
    %s77 = ssub.s32 %s15, %s27
    %s78 = ssub.s32 %s16, %s23
    %s79 = sor.u32 %s77, %s78
    %p80 = scmp.eq.s32.totalorder %s79, 0
    %s82 = sadd.s32 %s81, 1
    %s83 = scalar_select %p80, %s81, %s82
    %p86 = pneg %p80
    %p87 = scmp.eq.s32.totalorder %s8, 1
    %p88 = por %p86, %p87
    %p89 = scmp.ne.s32.totalorder %s81, %s84
    %p90 = scmp.eq.s32.totalorder %s8, 0
    %p91 = por %p89, %p90
    %p92 = scmp.ne.s32.totalorder %s81, %s84
    %p93 = scmp.eq.s32.totalorder %s13, 1
    %p94 = por %p92, %p93
    %p95 = scmp.ne.s32.totalorder %s84, %s85
    %p96 = scmp.eq.s32.totalorder %s13, 0
    %p97 = por %p95, %p96
    %p98 = scmp.ne.s32.totalorder %s84, %s85
    %p99 = scmp.eq.s32.totalorder %s14, 1
    %p100 = por %p98, %p99
    %p102 = scmp.ne.s32.totalorder %s85, %s101
    %p103 = scmp.eq.s32.totalorder %s14, 0
    %p104 = por %p102, %p103
    %p105 = scmp.le.s32.totalorder 1, %s8
    %p106 = scmp.lt.s32.totalorder %s8, 3
    %p107 = pnand %p105, %p106
    %p108 = pneg %p107
    // Predicated region
    $region9: #{deconv_block_forward.6} parent=5 // pred_check
      _
    $region10: #{deconv_block_forward.6} parent=5 // pred_check_branch
      %110 = sbr.rel (%p107) target = $region12
    $region11: #{deconv_block_forward.6} parent=5 // pred_region
      %s111 = ssub.s32 %s8, 1
      // Predicated region
      $region13: #{deconv_block_forward.6} parent=11 // pred_check
        %p112 = pneg %p41
      $region14: #{deconv_block_forward.6} parent=11 // pred_check_branch
        %114 = sbr.rel (%p112) target = $region16
      $region15: #{deconv_block_forward.6} parent=11 // pred_region
        _
      $region16: #{deconv_block_forward.6} parent=11 // pred_fallthru
        _
    $region12: #{deconv_block_forward.6} parent=5 // pred_fallthru
      _
    %p115 = scmp.lt.s32.totalorder %s8, 2
    // Predicated region
    $region17: #{deconv_block_forward.6} parent=5 // pred_check
      %p116 = pneg %p115
    $region18: #{deconv_block_forward.6} parent=5 // pred_check_branch
      %118 = sbr.rel (%p116) target = $region20
    $region19: #{deconv_block_forward.6} parent=5 // pred_region
      // Predicated region
      $region21: #{deconv_block_forward.6} parent=19 // pred_check
        %p119 = pneg %p63
      $region22: #{deconv_block_forward.6} parent=19 // pred_check_branch
        %121 = sbr.rel (%p119) target = $region24
      $region23: #{deconv_block_forward.6} parent=19 // pred_region
        %s122 = smul.u32 2, %s16
        %p123 = scmp.lt.s32.totalorder %s15, 1
        %s124 = scalar_select %p123, %s15, 1
        %p125 = scmp.lt.s32.totalorder %s122, 1
        %s126 = scalar_select %p125, %s122, 1
        %s127 = smul.addr %s124, 16
        %s128 = sadd.s32 %s126, %s127
        %s129 = smul.addr %s128, 4
        %s130 = scalar_lea.vmem %s1, %s129
        %s131 = smul.u32 2, %s16
      $region24: #{deconv_block_forward.6} parent=19 // pred_fallthru
        _
    $region20: #{deconv_block_forward.6} parent=5 // pred_fallthru
      _
    %p132 = scmp.le.s32.totalorder 1, %s8
    %p133 = scmp.lt.s32.totalorder %s8, 3
    %p134 = pnand %p132, %p133
    %p135 = pneg %p134
    // Predicated region
    $region25: #{deconv_block_forward.6} parent=5 // pred_check
      _
    $region26: #{deconv_block_forward.6} parent=5 // pred_check_branch
      %137 = sbr.rel (%p134) target = $region28
    $region27: #{deconv_block_forward.6} parent=5 // pred_region
      %s138 = ssub.s32 %s8, 1
      %p139 = pneg %p41
      %p140 = pneg %p38
      %s141 = smul.u32 2, %s18
      %p142 = scmp.lt.s32.totalorder %s17, 1
      %s143 = scalar_select %p142, %s17, 1
      %p144 = scmp.lt.s32.totalorder %s141, 1
      %s145 = scalar_select %p144, %s141, 1
      %s146 = smul.addr %s143, 16
      %s147 = sadd.s32 %s145, %s146
      %s148 = smul.addr %s147, 4
      %s149 = scalar_lea.vmem %s1, %s148
      %p150 = pneg %p69
      %p151 = pneg %p66
      %p152 = pneg %p97
      %p153 = pneg %p94
      %s154 = smul.u32 2, %s18
      %p155 = scmp.lt.s32.totalorder %s17, 1
      %s156 = scalar_select %p155, %s17, 1
      %p157 = scmp.lt.s32.totalorder %s154, 1
      %s158 = scalar_select %p157, %s154, 1
      %s159 = smul.addr %s156, 8
      %s160 = sadd.s32 %s158, %s159
      %s161 = smul.addr %s160, 8
      %s162 = scalar_lea.vmem %s2, %s161
      %s163 = smul.u32 2, %s18
      %p164 = scmp.lt.s32.totalorder %s17, 1
      %s165 = scalar_select %p164, %s17, 1
      %p166 = scmp.lt.s32.totalorder %s163, 1
      %s167 = scalar_select %p166, %s163, 1
      %s168 = smul.addr %s165, 16
      %s169 = sadd.s32 %s167, %s168
      %s170 = smul.addr %s169, 4
      %s171 = scalar_lea.vmem %s1, %s170
      %s172 = smul.u32 2, %s18
      %s173 = smul.u32 2, %s18
      %p174 = scmp.lt.s32.totalorder %s17, 1
      %s175 = scalar_select %p174, %s17, 1
      %p176 = scmp.lt.s32.totalorder %s173, 1
      %s177 = scalar_select %p176, %s173, 1
      %s178 = smul.addr %s175, 8
      %s179 = sadd.s32 %s177, %s178
      %s180 = smul.addr %s179, 8
      %s181 = scalar_lea.vmem %s2, %s180
      %s182 = smul.u32 2, %s18
      %v184 = vld [vmem:[%s0] sm:$0xf]
      %v185 = vld [vmem:[%s0 + $0x4] sm:$0xf]
      %v186 = vld [vmem:[%s0 + $0x8] sm:$0xf]
      %v187 = vld [vmem:[%s0 + $0xc] sm:$0xf]
      %v188 = vld [vmem:[%s171] sm:$0xff]
      %v189 = vld [vmem:[%s171 + $0x8] sm:$0xff]
      %v190 = vld [vmem:[%s171 + $0x10] sm:$0xff]
      %v191 = vld [vmem:[%s171 + $0x18] sm:$0xff]
      %v192 = vld [vmem:[%s171 + $0x20] sm:$0xff]
      %v193 = vld [vmem:[%s171 + $0x28] sm:$0xff]
      %v194 = vld [vmem:[%s171 + $0x30] sm:$0xff]
      %v195 = vld [vmem:[%s171 + $0x38] sm:$0xff]
      %v200 = vunpack.c.l.b16 %v184
      %v201 = vunpack.c.l.b16 %v185
      %v202 = vunpack.c.l.b16 %v186
      %v203 = vunpack.c.l.b16 %v187
      %v204 = vpack.c.b16 %v201, %v200
      %v205 = vpack.c.b16 %v203, %v202
      %v214 = vunpack.c.l.b16 %v188
      %v215 = vunpack.c.h.b16 %v188
      %v216 = vunpack.c.l.b16 %v189
      %v217 = vunpack.c.h.b16 %v189
      %v218 = vunpack.c.l.b16 %v190
      %v219 = vunpack.c.h.b16 %v190
      %v220 = vunpack.c.l.b16 %v191
      %v221 = vunpack.c.h.b16 %v191
      %v222 = vunpack.c.l.b16 %v192
      %v223 = vunpack.c.h.b16 %v192
      %v224 = vunpack.c.l.b16 %v193
      %v225 = vunpack.c.h.b16 %v193
      %v226 = vunpack.c.l.b16 %v194
      %v227 = vunpack.c.h.b16 %v194
      %v228 = vunpack.c.l.b16 %v195
      %v229 = vunpack.c.h.b16 %v195
      %v230 = vpack.c.b16 %v216, %v214
      %v231 = vpack.c.b16 %v217, %v215
      %v232 = vpack.c.b16 %v220, %v218
      %v233 = vpack.c.b16 %v221, %v219
      %v234 = vpack.c.b16 %v224, %v222
      %v235 = vpack.c.b16 %v225, %v223
      %v236 = vpack.c.b16 %v228, %v226
      %v237 = vpack.c.b16 %v229, %v227
      %vm246 = vcmask 523264
      %v248 = vsel %vm246, %v204, 0
      %v251 = vsel %vm246, %v205, 0
      %253 = vmatpush.bf16.msra.mxu0 0
      %254 = vmatpush.bf16.msra.mxu0 0
      %255 = vmatpush.bf16.msra.mxu0 0
      %256 = vmatpush.bf16.msra.mxu0 0
      %257 = vmatpush.bf16.msra.mxu0 %v236
      %258 = vmatpush.bf16.msra.mxu0 %v234
      %259 = vmatpush.bf16.msra.mxu0 %v232
      %260 = vmatpush.bf16.msra.mxu0 %v230
      %261 = vmatmul.bf16.gmra.mxu0 %v248
      %v262 = vpop.f32.mrf.mxu0
      %v263 = vadd.f32 0.0, %v262
      %v264 = vpop.f32.mrf.mxu0
      %v265 = vadd.f32 0.0, %v264
      %266 = vmatmul.bf16.gmra.mxu0 %v251
      %v267 = vpop.f32.mrf.mxu0
      %v268 = vadd.f32 0.0, %v267
      %v269 = vpop.f32.mrf.mxu0
      %v270 = vadd.f32 0.0, %v269
      %271 = vdwg.mxu0
      %272 = vmatpush.bf16.msra.mxu0 0
      %273 = vmatpush.bf16.msra.mxu0 0
      %274 = vmatpush.bf16.msra.mxu0 0
      %275 = vmatpush.bf16.msra.mxu0 0
      %276 = vmatpush.bf16.msra.mxu0 %v237
      %277 = vmatpush.bf16.msra.mxu0 %v235
      %278 = vmatpush.bf16.msra.mxu0 %v233
      %279 = vmatpush.bf16.msra.mxu0 %v231
      %280 = vmatmul.bf16.gmra.mxu0 %v248
      %v281 = vpop.f32.mrf.mxu0
      %v282 = vadd.f32 0.0, %v281
      %v283 = vpop.f32.mrf.mxu0
      %v284 = vadd.f32 0.0, %v283
      %285 = vmatmul.bf16.gmra.mxu0 %v251
      %v286 = vpop.f32.mrf.mxu0
      %v287 = vadd.f32 0.0, %v286
      %v288 = vpop.f32.mrf.mxu0
      %v289 = vadd.f32 0.0, %v288
      %290 = vdwg.mxu0
      %291 = vst [vmem:[%s181] sm:$0xff] %v263
      %292 = vst [vmem:[%s181 + $0x8] sm:$0xff] %v282
      %293 = vst [vmem:[%s181 + $0x10] sm:$0xff] %v265
      %294 = vst [vmem:[%s181 + $0x18] sm:$0xff] %v284
      %295 = vst [vmem:[%s181 + $0x20] sm:$0xff] %v268
      %296 = vst [vmem:[%s181 + $0x28] sm:$0xff] %v287
      %297 = vst [vmem:[%s181 + $0x30] sm:$0xff] %v270
      %298 = vst [vmem:[%s181 + $0x38] sm:$0xff] %v289
      %s299 = smul.u32 2, %s18
      %p300 = scmp.lt.s32.totalorder %s17, 1
      %s301 = scalar_select %p300, %s17, 1
      %p302 = scmp.lt.s32.totalorder %s299, 1
      %s303 = scalar_select %p302, %s299, 1
      %s304 = smul.addr %s301, 8
      %s305 = sadd.s32 %s303, %s304
      %s306 = smul.addr %s305, 8
      %s307 = scalar_lea.vmem %s2, %s306
      // Predicated region
      $region29: #{deconv_block_forward.6} parent=27 // pred_check
        %p308 = pneg %p94
      $region30: #{deconv_block_forward.6} parent=27 // pred_check_branch
        %310 = sbr.rel (%p308) target = $region32
      $region31: #{deconv_block_forward.6} parent=27 // pred_region
        %s311 = smul.u32 2, %s18
      $region32: #{deconv_block_forward.6} parent=27 // pred_fallthru
        _
    $region28: #{deconv_block_forward.6} parent=5 // pred_fallthru
      _
    %p312 = scmp.le.s32.totalorder 2, %s8
    // Predicated region
    $region33: #{deconv_block_forward.6} parent=5 // pred_check
      %p313 = pneg %p312
    $region34: #{deconv_block_forward.6} parent=5 // pred_check_branch
      %315 = sbr.rel (%p313) target = $region36
    $region35: #{deconv_block_forward.6} parent=5 // pred_region
      %s316 = ssub.s32 %s8, 2
      // Predicated region
      $region37: #{deconv_block_forward.6} parent=35 // pred_check
        %p317 = pneg %p100
      $region38: #{deconv_block_forward.6} parent=35 // pred_check_branch
        %319 = sbr.rel (%p317) target = $region40
      $region39: #{deconv_block_forward.6} parent=35 // pred_region
        %s320 = smul.u32 2, %s20
        %p321 = scmp.lt.s32.totalorder %s19, 1
        %s322 = scalar_select %p321, %s19, 1
        %p323 = scmp.lt.s32.totalorder %s320, 1
        %s324 = scalar_select %p323, %s320, 1
        %s325 = smul.addr %s322, 8
        %s326 = sadd.s32 %s324, %s325
        %s327 = smul.addr %s326, 8
        %s328 = scalar_lea.vmem %s2, %s327
      $region40: #{deconv_block_forward.6} parent=35 // pred_fallthru
        _
    $region36: #{deconv_block_forward.6} parent=5 // pred_fallthru
      _
  $region6: #{deconv_block_forward.6} parent=0 // loop_footer
    %s12 = sadd.s32 1, %s8
  $region7: #{deconv_block_forward.6} parent=0 // loop_footer_branch
    %7 = sbr.rel target = $region3
  $region8: #{deconv_block_forward.6} parent=0 // loop_exit
    _

// kernel: squeeze.35
$region0: #{squeeze.35}
  %s0 = inlined_call_operand.vmem [shape: f32[64], index: 0, kind: input, shape index: {}]
  %s1 = inlined_call_operand.vmem [shape: f32[2,32], index: 1, kind: output, shape index: {}]
  $region1: #{squeeze.35} parent=0
    #allocation0 [shape = 'u8[4096]{0}', space=vmem, size = 0x1000, scoped, tag = 'scoped mem for output reshape']
    #allocation1 [shape = 'u8[4096]{0}', space=vmem, size = 0x1000, scoped, tag = 'scoped mem for input reshape']
    %s3 = ssub.s32 2, 1
    %v4 = vld [vmem:[%s0] sm:%s3]
    %5 = vst [vmem:[#allocation1] sm:%s3] %v4
    %v6 = vld [vmem:[#allocation1] sm:$0x1]
    %vm7 = vcmask 261120
    %8 = vst.msk [vmem:[#allocation0] sm:$0x1] %vm7, %v6
    %v9 = vld [vmem:[#allocation1] sm:$0x1]
    %10 = vrot.lane.b32.xlu0 %v9, 96
    %v11 = vpop.permute.xlu0 %10
    %vm12 = vcmask 261120
    %s13 = scalar_lea.vmem [#allocation0], 1
    %14 = vst.msk [vmem:[%s13] sm:$0x1] %vm12, %v11
    %s16 = ssub.s32 4, 1
    %v17 = vld [vmem:[#allocation0] sm:%s16]
    %s19 = ssub.s32 4, 1
    %20 = vst [vmem:[%s1] sm:%s19] %v17

// kernel: deconv_block_forward.10
$region0: #{deconv_block_forward.10}
  #allocation0 [shape = 'u32[]', space=smem, size = 0x4, offset = 0x4, fixed_abs, tag = 'smem constant byte address 0x4 - core index']
  #allocation1 [shape = 'u32[72,128]{1,0:T(1,128)}', space=vmem, size = 0x9000, scoped, tag = 'internal scratch']
  %s0 = inlined_call_operand.vmem [shape: f32[64,1024], index: 0, kind: input, shape index: {}]
  %s1 = inlined_call_operand.vmem [shape: f32[64,1], index: 1, kind: output, shape index: {0}]
  %s2 = inlined_call_operand.vmem [shape: f32[64,1], index: 2, kind: output, shape index: {1}]
  %3 = xla_tuple %s1, %s2
  %s4 = sld [smem:[#allocation0]]
  $region45: #{deconv_block_forward.10} parent=0
    _
  %s6 = ssub.s32 1, %s4
  %s7 = scalar_select 0, %s6, %s4
  loop: start=0, step=1, limit=4
  $region2: #{deconv_block_forward.10} parent=0 // loop_pre_header
    _
  $region3: #{deconv_block_forward.10} parent=0 // loop_header
    %s9 = sphi 0, %s13
    %p10 = scmp.ge.s32.totalorder %s9, 4
    %s19 = sphi 0, %s21
    %s22 = sphi 0, %s19
    %s23 = sphi 0, %s22
    %s39 = sphi 0, %s23
    %s45 = sphi 0, %s47
    %s48 = sphi 0, %s45
    %s49 = sphi 0, %s48
    %s65 = sphi 0, %s49
    %s71 = sphi 0, %s73
    %s74 = sphi 0, %s71
    %s75 = sphi 0, %s74
    %s91 = sphi 0, %s75
  $region4: #{deconv_block_forward.10} parent=0 // loop_header_branch
    %12 = sbr.rel (%p10) target = $region8
  $region5: #{deconv_block_forward.10} parent=0 // loop_body
    %s14 = ssub.s32 %s9, 1
    %s15 = ssub.s32 %s9, 2
    %s16 = sadd.s32 %s9, 1
    %s17 = ssub.s32 %s9, %s16
    %p18 = scmp.eq.s32.totalorder %s17, 0
    %s20 = sadd.s32 %s19, 1
    %s21 = scalar_select %p18, %s19, %s20
    %p24 = pneg %p18
    %p25 = scmp.eq.s32.totalorder %s9, 1
    %p26 = por %p24, %p25
    %p27 = scmp.ne.s32.totalorder %s19, %s22
    %p28 = scmp.eq.s32.totalorder %s9, 0
    %p29 = por %p27, %p28
    %p30 = scmp.ne.s32.totalorder %s19, %s22
    %p31 = scmp.eq.s32.totalorder %s14, 1
    %p32 = por %p30, %p31
    %p33 = scmp.ne.s32.totalorder %s22, %s23
    %p34 = scmp.eq.s32.totalorder %s14, 0
    %p35 = por %p33, %p34
    %p36 = scmp.ne.s32.totalorder %s22, %s23
    %p37 = scmp.eq.s32.totalorder %s15, 1
    %p38 = por %p36, %p37
    %p40 = scmp.ne.s32.totalorder %s23, %s39
    %p41 = scmp.eq.s32.totalorder %s15, 0
    %p42 = por %p40, %p41
    %s43 = ssub.s32 %s9, %s16
    %p44 = scmp.eq.s32.totalorder %s43, 0
    %s46 = sadd.s32 %s45, 1
    %s47 = scalar_select %p44, %s45, %s46
    %p50 = pneg %p44
    %p51 = scmp.eq.s32.totalorder %s9, 1
    %p52 = por %p50, %p51
    %p53 = scmp.ne.s32.totalorder %s45, %s48
    %p54 = scmp.eq.s32.totalorder %s9, 0
    %p55 = por %p53, %p54
    %p56 = scmp.ne.s32.totalorder %s45, %s48
    %p57 = scmp.eq.s32.totalorder %s14, 1
    %p58 = por %p56, %p57
    %p59 = scmp.ne.s32.totalorder %s48, %s49
    %p60 = scmp.eq.s32.totalorder %s14, 0
    %p61 = por %p59, %p60
    %p62 = scmp.ne.s32.totalorder %s48, %s49
    %p63 = scmp.eq.s32.totalorder %s15, 1
    %p64 = por %p62, %p63
    %p66 = scmp.ne.s32.totalorder %s49, %s65
    %p67 = scmp.eq.s32.totalorder %s15, 0
    %p68 = por %p66, %p67
    %s69 = ssub.s32 %s9, %s16
    %p70 = scmp.eq.s32.totalorder %s69, 0
    %s72 = sadd.s32 %s71, 1
    %s73 = scalar_select %p70, %s71, %s72
    %p76 = pneg %p70
    %p77 = scmp.eq.s32.totalorder %s9, 1
    %p78 = por %p76, %p77
    %p79 = scmp.ne.s32.totalorder %s71, %s74
    %p80 = scmp.eq.s32.totalorder %s9, 0
    %p81 = por %p79, %p80
    %p82 = scmp.ne.s32.totalorder %s71, %s74
    %p83 = scmp.eq.s32.totalorder %s14, 1
    %p84 = por %p82, %p83
    %p85 = scmp.ne.s32.totalorder %s74, %s75
    %p86 = scmp.eq.s32.totalorder %s14, 0
    %p87 = por %p85, %p86
    %p88 = scmp.ne.s32.totalorder %s74, %s75
    %p89 = scmp.eq.s32.totalorder %s15, 1
    %p90 = por %p88, %p89
    %p92 = scmp.ne.s32.totalorder %s75, %s91
    %p93 = scmp.eq.s32.totalorder %s15, 0
    %p94 = por %p92, %p93
    %p95 = scmp.le.s32.totalorder 1, %s9
    %p96 = scmp.lt.s32.totalorder %s9, 3
    %p97 = pnand %p95, %p96
    %p98 = pneg %p97
    // Predicated region
    $region9: #{deconv_block_forward.10} parent=5 // pred_check
      _
    $region10: #{deconv_block_forward.10} parent=5 // pred_check_branch
      %100 = sbr.rel (%p97) target = $region12
    $region11: #{deconv_block_forward.10} parent=5 // pred_region
      %s101 = ssub.s32 %s9, 1
    $region12: #{deconv_block_forward.10} parent=5 // pred_fallthru
      _
    %p102 = scmp.lt.s32.totalorder %s9, 2
    // Predicated region
    $region13: #{deconv_block_forward.10} parent=5 // pred_check
      %p103 = pneg %p102
    $region14: #{deconv_block_forward.10} parent=5 // pred_check_branch
      %105 = sbr.rel (%p103) target = $region16
    $region15: #{deconv_block_forward.10} parent=5 // pred_region
      // Predicated region
      $region17: #{deconv_block_forward.10} parent=15 // pred_check
        %p106 = pneg %p29
      $region18: #{deconv_block_forward.10} parent=15 // pred_check_branch
        %108 = sbr.rel (%p106) target = $region20
      $region19: #{deconv_block_forward.10} parent=15 // pred_region
        %s109 = smul.u32 4, %s9
        %p110 = scmp.lt.s32.totalorder %s109, 7
        %s111 = scalar_select %p110, %s109, 7
        %s112 = smul.addr %s111, 8
        %s113 = smul.addr %s112, 8
        %s114 = scalar_lea.vmem %s0, %s113
        %s115 = smul.u32 4, %s9
      $region20: #{deconv_block_forward.10} parent=15 // pred_fallthru
        _
    $region16: #{deconv_block_forward.10} parent=5 // pred_fallthru
      _
    %p116 = scmp.le.s32.totalorder 1, %s9
    %p117 = scmp.lt.s32.totalorder %s9, 3
    %p118 = pnand %p116, %p117
    %p119 = pneg %p118
    // Predicated region
    $region21: #{deconv_block_forward.10} parent=5 // pred_check
      _
    $region22: #{deconv_block_forward.10} parent=5 // pred_check_branch
      %121 = sbr.rel (%p118) target = $region24
    $region23: #{deconv_block_forward.10} parent=5 // pred_region
      %s122 = ssub.s32 %s9, 1
      %s123 = smul.u32 4, %s14
      %p124 = scmp.lt.s32.totalorder %s123, 7
      %s125 = scalar_select %p124, %s123, 7
      %s126 = smul.addr %s125, 8
      %s127 = smul.addr %s126, 8
      %s128 = scalar_lea.vmem %s0, %s127
      %p129 = pneg %p35
      %p130 = pneg %p32
      %p131 = pneg %p61
      %p132 = pneg %p58
      %s133 = smul.u32 4, %s14
      %p134 = scmp.lt.s32.totalorder %s133, 7
      %s135 = scalar_select %p134, %s133, 7
      %s136 = smul.addr %s135, 8
      %s137 = scalar_lea.vmem %s1, %s136
      %p138 = pneg %p87
      %p139 = pneg %p84
      %s140 = smul.u32 4, %s14
      %p141 = scmp.lt.s32.totalorder %s140, 7
      %s142 = scalar_select %p141, %s140, 7
      %s143 = smul.addr %s142, 8
      %s144 = scalar_lea.vmem %s2, %s143
      %s145 = smul.u32 4, %s14
      %p146 = scmp.lt.s32.totalorder %s145, 7
      %s147 = scalar_select %p146, %s145, 7
      %s148 = smul.addr %s147, 8
      %s149 = smul.addr %s148, 8
      %s150 = scalar_lea.vmem %s0, %s149
      %s151 = smul.u32 4, %s14
      %s152 = smul.u32 4, %s14
      %p153 = scmp.lt.s32.totalorder %s152, 7
      %s154 = scalar_select %p153, %s152, 7
      %s155 = smul.addr %s154, 8
      %s156 = scalar_lea.vmem %s1, %s155
      %s157 = smul.u32 4, %s14
      %s158 = smul.u32 4, %s14
      %p159 = scmp.lt.s32.totalorder %s158, 7
      %s160 = scalar_select %p159, %s158, 7
      %s161 = smul.addr %s160, 8
      %s162 = scalar_lea.vmem %s2, %s161
      %s163 = smul.u32 4, %s14
      %v164 = vld [vmem:[%s150] sm:$0xff]
      %v165 = vld [vmem:[%s150 + $0x8] sm:$0xff]
      %v166 = vld [vmem:[%s150 + $0x10] sm:$0xff]
      %v167 = vld [vmem:[%s150 + $0x18] sm:$0xff]
      %v168 = vld [vmem:[%s150 + $0x20] sm:$0xff]
      %v169 = vld [vmem:[%s150 + $0x28] sm:$0xff]
      %v170 = vld [vmem:[%s150 + $0x30] sm:$0xff]
      %v171 = vld [vmem:[%s150 + $0x38] sm:$0xff]
      %v172 = vld [vmem:[%s150 + $0x40] sm:$0xff]
      %v173 = vld [vmem:[%s150 + $0x48] sm:$0xff]
      %v174 = vld [vmem:[%s150 + $0x50] sm:$0xff]
      %v175 = vld [vmem:[%s150 + $0x58] sm:$0xff]
      %v176 = vld [vmem:[%s150 + $0x60] sm:$0xff]
      %v177 = vld [vmem:[%s150 + $0x68] sm:$0xff]
      %v178 = vld [vmem:[%s150 + $0x70] sm:$0xff]
      %v179 = vld [vmem:[%s150 + $0x78] sm:$0xff]
      %v180 = vld [vmem:[%s150 + $0x80] sm:$0xff]
      %v181 = vld [vmem:[%s150 + $0x88] sm:$0xff]
      %v182 = vld [vmem:[%s150 + $0x90] sm:$0xff]
      %v183 = vld [vmem:[%s150 + $0x98] sm:$0xff]
      %v184 = vld [vmem:[%s150 + $0xa0] sm:$0xff]
      %v185 = vld [vmem:[%s150 + $0xa8] sm:$0xff]
      %v186 = vld [vmem:[%s150 + $0xb0] sm:$0xff]
      %v187 = vld [vmem:[%s150 + $0xb8] sm:$0xff]
      %v188 = vld [vmem:[%s150 + $0xc0] sm:$0xff]
      %v189 = vld [vmem:[%s150 + $0xc8] sm:$0xff]
      %v190 = vld [vmem:[%s150 + $0xd0] sm:$0xff]
      %v191 = vld [vmem:[%s150 + $0xd8] sm:$0xff]
      %v192 = vld [vmem:[%s150 + $0xe0] sm:$0xff]
      %v193 = vld [vmem:[%s150 + $0xe8] sm:$0xff]
      %v194 = vld [vmem:[%s150 + $0xf0] sm:$0xff]
      %v195 = vld [vmem:[%s150 + $0xf8] sm:$0xff]
      %v196 = vlaneseq
      %v197 = vand.u32 %v196, 127
      %v198 = vadd.s32 %v197, 128
      %v199 = vadd.s32 %v197, 256
      %v200 = vadd.s32 %v197, 384
      %v201 = vadd.s32 %v197, 512
      %v202 = vadd.s32 %v197, 640
      %v203 = vadd.s32 %v197, 768
      %v204 = vadd.s32 %v197, 896
      %vm205 = vcmp.lt.s32.totalorder %v197, 1024
      %vm206 = vcmp.lt.s32.totalorder %v198, 1024
      %vm207 = vcmp.lt.s32.totalorder %v199, 1024
      %vm208 = vcmp.lt.s32.totalorder %v200, 1024
      %vm209 = vcmp.lt.s32.totalorder %v201, 1024
      %vm210 = vcmp.lt.s32.totalorder %v202, 1024
      %vm211 = vcmp.lt.s32.totalorder %v203, 1024
      %vm212 = vcmp.lt.s32.totalorder %v204, 1024
      %v213 = vsel %vm205, 1, 0
      %v214 = vsel %vm206, 1, 0
      %v215 = vsel %vm207, 1, 0
      %v216 = vsel %vm208, 1, 0
      %v217 = vsel %vm209, 1, 0
      %v218 = vsel %vm210, 1, 0
      %v219 = vsel %vm211, 1, 0
      %v220 = vsel %vm212, 1, 0
      %v221 = vcvt.s32.f32 %v213
      %v222 = vcvt.s32.f32 %v214
      %v223 = vcvt.s32.f32 %v215
      %v224 = vcvt.s32.f32 %v216
      %v225 = vcvt.s32.f32 %v217
      %v226 = vcvt.s32.f32 %v218
      %v227 = vcvt.s32.f32 %v219
      %v228 = vcvt.s32.f32 %v220
      %v229 = vmul.f32 %v164, %v221
      %v230 = vmul.f32 %v165, %v222
      %v231 = vmul.f32 %v166, %v223
      %v232 = vmul.f32 %v167, %v224
      %v233 = vmul.f32 %v168, %v225
      %v234 = vmul.f32 %v169, %v226
      %v235 = vmul.f32 %v170, %v227
      %v236 = vmul.f32 %v171, %v228
      %v237 = vmul.f32 %v172, %v221
      %v238 = vmul.f32 %v173, %v222
      %v239 = vmul.f32 %v174, %v223
      %v240 = vmul.f32 %v175, %v224
      %v241 = vmul.f32 %v176, %v225
      %v242 = vmul.f32 %v177, %v226
      %v243 = vmul.f32 %v178, %v227
      %v244 = vmul.f32 %v179, %v228
      %v245 = vmul.f32 %v180, %v221
      %v246 = vmul.f32 %v181, %v222
      %v247 = vmul.f32 %v182, %v223
      %v248 = vmul.f32 %v183, %v224
      %v249 = vmul.f32 %v184, %v225
      %v250 = vmul.f32 %v185, %v226
      %v251 = vmul.f32 %v186, %v227
      %v252 = vmul.f32 %v187, %v228
      %v253 = vmul.f32 %v188, %v221
      %v254 = vmul.f32 %v189, %v222
      %v255 = vmul.f32 %v190, %v223
      %v256 = vmul.f32 %v191, %v224
      %v257 = vmul.f32 %v192, %v225
      %v258 = vmul.f32 %v193, %v226
      %v259 = vmul.f32 %v194, %v227
      %v260 = vmul.f32 %v195, %v228
      %v261 = vadd.f32 %v229, %v230
      %v262 = vadd.f32 %v261, %v231
      %v263 = vadd.f32 %v262, %v232
      %v264 = vadd.f32 %v263, %v233
      %v265 = vadd.f32 %v264, %v234
      %v266 = vadd.f32 %v265, %v235
      %v267 = vadd.f32 %v266, %v236
      %268 = vadd.xlane.f32.xlu0 %v267
      %v269 = vpop.xlane.xlu0 %268
      %v270 = vadd.f32 %v237, %v238
      %v271 = vadd.f32 %v270, %v239
      %v272 = vadd.f32 %v271, %v240
      %v273 = vadd.f32 %v272, %v241
      %v274 = vadd.f32 %v273, %v242
      %v275 = vadd.f32 %v274, %v243
      %v276 = vadd.f32 %v275, %v244
      %277 = vadd.xlane.f32.xlu0 %v276
      %v278 = vpop.xlane.xlu0 %277
      %v279 = vadd.f32 %v245, %v246
      %v280 = vadd.f32 %v279, %v247
      %v281 = vadd.f32 %v280, %v248
      %v282 = vadd.f32 %v281, %v249
      %v283 = vadd.f32 %v282, %v250
      %v284 = vadd.f32 %v283, %v251
      %v285 = vadd.f32 %v284, %v252
      %286 = vadd.xlane.f32.xlu0 %v285
      %v287 = vpop.xlane.xlu0 %286
      %v288 = vadd.f32 %v253, %v254
      %v289 = vadd.f32 %v288, %v255
      %v290 = vadd.f32 %v289, %v256
      %v291 = vadd.f32 %v290, %v257
      %v292 = vadd.f32 %v291, %v258
      %v293 = vadd.f32 %v292, %v259
      %v294 = vadd.f32 %v293, %v260
      %295 = vadd.xlane.f32.xlu0 %v294
      %v296 = vpop.xlane.xlu0 %295
      %vm297 = vcmask 7168
      %298 = vst.msk [vmem:[%s156] sm:$0xff] %vm297, %v269
      %299 = vst.msk [vmem:[%s156 + $0x8] sm:$0xff] %vm297, %v278
      %300 = vst.msk [vmem:[%s156 + $0x10] sm:$0xff] %vm297, %v287
      %301 = vst.msk [vmem:[%s156 + $0x18] sm:$0xff] %vm297, %v296
      %v302 = vmul.f32 %v229, %v164
      %v303 = vmul.f32 %v230, %v165
      %v304 = vmul.f32 %v231, %v166
      %v305 = vmul.f32 %v232, %v167
      %v306 = vmul.f32 %v233, %v168
      %v307 = vmul.f32 %v234, %v169
      %v308 = vmul.f32 %v235, %v170
      %v309 = vmul.f32 %v236, %v171
      %v310 = vmul.f32 %v237, %v172
      %v311 = vmul.f32 %v238, %v173
      %v312 = vmul.f32 %v239, %v174
      %v313 = vmul.f32 %v240, %v175
      %v314 = vmul.f32 %v241, %v176
      %v315 = vmul.f32 %v242, %v177
      %v316 = vmul.f32 %v243, %v178
      %v317 = vmul.f32 %v244, %v179
      %v318 = vmul.f32 %v245, %v180
      %v319 = vmul.f32 %v246, %v181
      %v320 = vmul.f32 %v247, %v182
      %v321 = vmul.f32 %v248, %v183
      %v322 = vmul.f32 %v249, %v184
      %v323 = vmul.f32 %v250, %v185
      %v324 = vmul.f32 %v251, %v186
      %v325 = vmul.f32 %v252, %v187
      %v326 = vmul.f32 %v253, %v188
      %v327 = vmul.f32 %v254, %v189
      %v328 = vmul.f32 %v255, %v190
      %v329 = vmul.f32 %v256, %v191
      %v330 = vmul.f32 %v257, %v192
      %v331 = vmul.f32 %v258, %v193
      %v332 = vmul.f32 %v259, %v194
      %v333 = vmul.f32 %v260, %v195
      %v334 = vadd.f32 %v302, %v303
      %v335 = vadd.f32 %v334, %v304
      %v336 = vadd.f32 %v335, %v305
      %v337 = vadd.f32 %v336, %v306
      %v338 = vadd.f32 %v337, %v307
      %v339 = vadd.f32 %v338, %v308
      %v340 = vadd.f32 %v339, %v309
      %341 = vadd.xlane.f32.xlu0 %v340
      %v342 = vpop.xlane.xlu0 %341
      %v343 = vadd.f32 %v310, %v311
      %v344 = vadd.f32 %v343, %v312
      %v345 = vadd.f32 %v344, %v313
      %v346 = vadd.f32 %v345, %v314
      %v347 = vadd.f32 %v346, %v315
      %v348 = vadd.f32 %v347, %v316
      %v349 = vadd.f32 %v348, %v317
      %350 = vadd.xlane.f32.xlu0 %v349
      %v351 = vpop.xlane.xlu0 %350
      %v352 = vadd.f32 %v318, %v319
      %v353 = vadd.f32 %v352, %v320
      %v354 = vadd.f32 %v353, %v321
      %v355 = vadd.f32 %v354, %v322
      %v356 = vadd.f32 %v355, %v323
      %v357 = vadd.f32 %v356, %v324
      %v358 = vadd.f32 %v357, %v325
      %359 = vadd.xlane.f32.xlu0 %v358
      %v360 = vpop.xlane.xlu0 %359
      %v361 = vadd.f32 %v326, %v327
      %v362 = vadd.f32 %v361, %v328
      %v363 = vadd.f32 %v362, %v329
      %v364 = vadd.f32 %v363, %v330
      %v365 = vadd.f32 %v364, %v331
      %v366 = vadd.f32 %v365, %v332
      %v367 = vadd.f32 %v366, %v333
      %368 = vadd.xlane.f32.xlu0 %v367
      %v369 = vpop.xlane.xlu0 %368
      %370 = vst.msk [vmem:[%s162] sm:$0xff] %vm297, %v342
      %371 = vst.msk [vmem:[%s162 + $0x8] sm:$0xff] %vm297, %v351
      %372 = vst.msk [vmem:[%s162 + $0x10] sm:$0xff] %vm297, %v360
      %373 = vst.msk [vmem:[%s162 + $0x18] sm:$0xff] %vm297, %v369
      %s374 = smul.u32 4, %s14
      %p375 = scmp.lt.s32.totalorder %s374, 7
      %s376 = scalar_select %p375, %s374, 7
      %s377 = smul.addr %s376, 8
      %s378 = scalar_lea.vmem %s1, %s377
      %s379 = smul.u32 4, %s14
      %p380 = scmp.lt.s32.totalorder %s379, 7
      %s381 = scalar_select %p380, %s379, 7
      %s382 = smul.addr %s381, 8
      %s383 = scalar_lea.vmem %s2, %s382
      // Predicated region
      $region25: #{deconv_block_forward.10} parent=23 // pred_check
        %p384 = pneg %p58
      $region26: #{deconv_block_forward.10} parent=23 // pred_check_branch
        %386 = sbr.rel (%p384) target = $region28
      $region27: #{deconv_block_forward.10} parent=23 // pred_region
        %s387 = smul.u32 4, %s14
      $region28: #{deconv_block_forward.10} parent=23 // pred_fallthru
        _
      // Predicated region
      $region29: #{deconv_block_forward.10} parent=23 // pred_check
        %p388 = pneg %p84
      $region30: #{deconv_block_forward.10} parent=23 // pred_check_branch
        %390 = sbr.rel (%p388) target = $region32
      $region31: #{deconv_block_forward.10} parent=23 // pred_region
        %s391 = smul.u32 4, %s14
      $region32: #{deconv_block_forward.10} parent=23 // pred_fallthru
        _
    $region24: #{deconv_block_forward.10} parent=5 // pred_fallthru
      _
    %p392 = scmp.le.s32.totalorder 2, %s9
    // Predicated region
    $region33: #{deconv_block_forward.10} parent=5 // pred_check
      %p393 = pneg %p392
    $region34: #{deconv_block_forward.10} parent=5 // pred_check_branch
      %395 = sbr.rel (%p393) target = $region36
    $region35: #{deconv_block_forward.10} parent=5 // pred_region
      %s396 = ssub.s32 %s9, 2
      // Predicated region
      $region37: #{deconv_block_forward.10} parent=35 // pred_check
        %p397 = pneg %p64
      $region38: #{deconv_block_forward.10} parent=35 // pred_check_branch
        %399 = sbr.rel (%p397) target = $region40
      $region39: #{deconv_block_forward.10} parent=35 // pred_region
        %s400 = smul.u32 4, %s15
        %p401 = scmp.lt.s32.totalorder %s400, 7
        %s402 = scalar_select %p401, %s400, 7
        %s403 = smul.addr %s402, 8
        %s404 = scalar_lea.vmem %s1, %s403
      $region40: #{deconv_block_forward.10} parent=35 // pred_fallthru
        _
      // Predicated region
      $region41: #{deconv_block_forward.10} parent=35 // pred_check
        %p405 = pneg %p90
      $region42: #{deconv_block_forward.10} parent=35 // pred_check_branch
        %407 = sbr.rel (%p405) target = $region44
      $region43: #{deconv_block_forward.10} parent=35 // pred_region
        %s408 = smul.u32 4, %s15
        %p409 = scmp.lt.s32.totalorder %s408, 7
        %s410 = scalar_select %p409, %s408, 7
        %s411 = smul.addr %s410, 8
        %s412 = scalar_lea.vmem %s2, %s411
      $region44: #{deconv_block_forward.10} parent=35 // pred_fallthru
        _
    $region36: #{deconv_block_forward.10} parent=5 // pred_fallthru
      _
  $region6: #{deconv_block_forward.10} parent=0 // loop_footer
    %s13 = sadd.s32 1, %s9
  $region7: #{deconv_block_forward.10} parent=0 // loop_footer_branch
    %8 = sbr.rel target = $region3
  $region8: #{deconv_block_forward.10} parent=0 // loop_exit
    _

// kernel: deconv_block_forward.11
$region0: #{deconv_block_forward.11}
  #allocation0 [shape = 'u32[]', space=smem, size = 0x4, offset = 0x4, fixed_abs, tag = 'smem constant byte address 0x4 - core index']
  #allocation1 [shape = 'u32[72,128]{1,0:T(1,128)}', space=vmem, size = 0x9000, scoped, tag = 'internal scratch']
  %s0 = inlined_call_operand.vmem [shape: f32[64,1024], index: 0, kind: input, shape index: {}]
  %s1 = inlined_call_operand.vmem [shape: f32[64,1], index: 1, kind: input, shape index: {}]
  %s2 = inlined_call_operand.vmem [shape: f32[64,1], index: 2, kind: input, shape index: {}]
  %s3 = inlined_call_operand.vmem [shape: f32[64,1024], index: 3, kind: output, shape index: {}]
  %s4 = sld [smem:[#allocation0]]
  $region45: #{deconv_block_forward.11} parent=0
    _
  %s6 = ssub.s32 1, %s4
  %s7 = scalar_select 0, %s6, %s4
  loop: start=0, step=1, limit=4
  $region2: #{deconv_block_forward.11} parent=0 // loop_pre_header
    _
  $region3: #{deconv_block_forward.11} parent=0 // loop_header
    %s9 = sphi 0, %s13
    %p10 = scmp.ge.s32.totalorder %s9, 4
    %s19 = sphi 0, %s21
    %s22 = sphi 0, %s19
    %s23 = sphi 0, %s22
    %s39 = sphi 0, %s23
    %s45 = sphi 0, %s47
    %s48 = sphi 0, %s45
    %s49 = sphi 0, %s48
    %s65 = sphi 0, %s49
    %s71 = sphi 0, %s73
    %s74 = sphi 0, %s71
    %s75 = sphi 0, %s74
    %s91 = sphi 0, %s75
    %s97 = sphi 0, %s99
    %s100 = sphi 0, %s97
    %s101 = sphi 0, %s100
    %s117 = sphi 0, %s101
  $region4: #{deconv_block_forward.11} parent=0 // loop_header_branch
    %12 = sbr.rel (%p10) target = $region8
  $region5: #{deconv_block_forward.11} parent=0 // loop_body
    %s14 = ssub.s32 %s9, 1
    %s15 = ssub.s32 %s9, 2
    %s16 = sadd.s32 %s9, 1
    %s17 = ssub.s32 %s9, %s16
    %p18 = scmp.eq.s32.totalorder %s17, 0
    %s20 = sadd.s32 %s19, 1
    %s21 = scalar_select %p18, %s19, %s20
    %p24 = pneg %p18
    %p25 = scmp.eq.s32.totalorder %s9, 1
    %p26 = por %p24, %p25
    %p27 = scmp.ne.s32.totalorder %s19, %s22
    %p28 = scmp.eq.s32.totalorder %s9, 0
    %p29 = por %p27, %p28
    %p30 = scmp.ne.s32.totalorder %s19, %s22
    %p31 = scmp.eq.s32.totalorder %s14, 1
    %p32 = por %p30, %p31
    %p33 = scmp.ne.s32.totalorder %s22, %s23
    %p34 = scmp.eq.s32.totalorder %s14, 0
    %p35 = por %p33, %p34
    %p36 = scmp.ne.s32.totalorder %s22, %s23
    %p37 = scmp.eq.s32.totalorder %s15, 1
    %p38 = por %p36, %p37
    %p40 = scmp.ne.s32.totalorder %s23, %s39
    %p41 = scmp.eq.s32.totalorder %s15, 0
    %p42 = por %p40, %p41
    %s43 = ssub.s32 %s9, %s16
    %p44 = scmp.eq.s32.totalorder %s43, 0
    %s46 = sadd.s32 %s45, 1
    %s47 = scalar_select %p44, %s45, %s46
    %p50 = pneg %p44
    %p51 = scmp.eq.s32.totalorder %s9, 1
    %p52 = por %p50, %p51
    %p53 = scmp.ne.s32.totalorder %s45, %s48
    %p54 = scmp.eq.s32.totalorder %s9, 0
    %p55 = por %p53, %p54
    %p56 = scmp.ne.s32.totalorder %s45, %s48
    %p57 = scmp.eq.s32.totalorder %s14, 1
    %p58 = por %p56, %p57
    %p59 = scmp.ne.s32.totalorder %s48, %s49
    %p60 = scmp.eq.s32.totalorder %s14, 0
    %p61 = por %p59, %p60
    %p62 = scmp.ne.s32.totalorder %s48, %s49
    %p63 = scmp.eq.s32.totalorder %s15, 1
    %p64 = por %p62, %p63
    %p66 = scmp.ne.s32.totalorder %s49, %s65
    %p67 = scmp.eq.s32.totalorder %s15, 0
    %p68 = por %p66, %p67
    %s69 = ssub.s32 %s9, %s16
    %p70 = scmp.eq.s32.totalorder %s69, 0
    %s72 = sadd.s32 %s71, 1
    %s73 = scalar_select %p70, %s71, %s72
    %p76 = pneg %p70
    %p77 = scmp.eq.s32.totalorder %s9, 1
    %p78 = por %p76, %p77
    %p79 = scmp.ne.s32.totalorder %s71, %s74
    %p80 = scmp.eq.s32.totalorder %s9, 0
    %p81 = por %p79, %p80
    %p82 = scmp.ne.s32.totalorder %s71, %s74
    %p83 = scmp.eq.s32.totalorder %s14, 1
    %p84 = por %p82, %p83
    %p85 = scmp.ne.s32.totalorder %s74, %s75
    %p86 = scmp.eq.s32.totalorder %s14, 0
    %p87 = por %p85, %p86
    %p88 = scmp.ne.s32.totalorder %s74, %s75
    %p89 = scmp.eq.s32.totalorder %s15, 1
    %p90 = por %p88, %p89
    %p92 = scmp.ne.s32.totalorder %s75, %s91
    %p93 = scmp.eq.s32.totalorder %s15, 0
    %p94 = por %p92, %p93
    %s95 = ssub.s32 %s9, %s16
    %p96 = scmp.eq.s32.totalorder %s95, 0
    %s98 = sadd.s32 %s97, 1
    %s99 = scalar_select %p96, %s97, %s98
    %p102 = pneg %p96
    %p103 = scmp.eq.s32.totalorder %s9, 1
    %p104 = por %p102, %p103
    %p105 = scmp.ne.s32.totalorder %s97, %s100
    %p106 = scmp.eq.s32.totalorder %s9, 0
    %p107 = por %p105, %p106
    %p108 = scmp.ne.s32.totalorder %s97, %s100
    %p109 = scmp.eq.s32.totalorder %s14, 1
    %p110 = por %p108, %p109
    %p111 = scmp.ne.s32.totalorder %s100, %s101
    %p112 = scmp.eq.s32.totalorder %s14, 0
    %p113 = por %p111, %p112
    %p114 = scmp.ne.s32.totalorder %s100, %s101
    %p115 = scmp.eq.s32.totalorder %s15, 1
    %p116 = por %p114, %p115
    %p118 = scmp.ne.s32.totalorder %s101, %s117
    %p119 = scmp.eq.s32.totalorder %s15, 0
    %p120 = por %p118, %p119
    %p121 = scmp.le.s32.totalorder 1, %s9
    %p122 = scmp.lt.s32.totalorder %s9, 3
    %p123 = pnand %p121, %p122
    %p124 = pneg %p123
    // Predicated region
    $region9: #{deconv_block_forward.11} parent=5 // pred_check
      _
    $region10: #{deconv_block_forward.11} parent=5 // pred_check_branch
      %126 = sbr.rel (%p123) target = $region12
    $region11: #{deconv_block_forward.11} parent=5 // pred_region
      %s127 = ssub.s32 %s9, 1
    $region12: #{deconv_block_forward.11} parent=5 // pred_fallthru
      _
    %p128 = scmp.lt.s32.totalorder %s9, 2
    // Predicated region
    $region13: #{deconv_block_forward.11} parent=5 // pred_check
      %p129 = pneg %p128
    $region14: #{deconv_block_forward.11} parent=5 // pred_check_branch
      %131 = sbr.rel (%p129) target = $region16
    $region15: #{deconv_block_forward.11} parent=5 // pred_region
      // Predicated region
      $region17: #{deconv_block_forward.11} parent=15 // pred_check
        %p132 = pneg %p29
      $region18: #{deconv_block_forward.11} parent=15 // pred_check_branch
        %134 = sbr.rel (%p132) target = $region20
      $region19: #{deconv_block_forward.11} parent=15 // pred_region
        %s135 = smul.u32 4, %s9
        %p136 = scmp.lt.s32.totalorder %s135, 7
        %s137 = scalar_select %p136, %s135, 7
        %s138 = smul.addr %s137, 8
        %s139 = smul.addr %s138, 8
        %s140 = scalar_lea.vmem %s0, %s139
        %s141 = smul.u32 4, %s9
      $region20: #{deconv_block_forward.11} parent=15 // pred_fallthru
        _
      // Predicated region
      $region21: #{deconv_block_forward.11} parent=15 // pred_check
        %p142 = pneg %p55
      $region22: #{deconv_block_forward.11} parent=15 // pred_check_branch
        %144 = sbr.rel (%p142) target = $region24
      $region23: #{deconv_block_forward.11} parent=15 // pred_region
        %s145 = smul.u32 4, %s9
        %p146 = scmp.lt.s32.totalorder %s145, 7
        %s147 = scalar_select %p146, %s145, 7
        %s148 = smul.addr %s147, 8
        %s149 = scalar_lea.vmem %s1, %s148
        %s150 = smul.u32 4, %s9
      $region24: #{deconv_block_forward.11} parent=15 // pred_fallthru
        _
      // Predicated region
      $region25: #{deconv_block_forward.11} parent=15 // pred_check
        %p151 = pneg %p81
      $region26: #{deconv_block_forward.11} parent=15 // pred_check_branch
        %153 = sbr.rel (%p151) target = $region28
      $region27: #{deconv_block_forward.11} parent=15 // pred_region
        %s154 = smul.u32 4, %s9
        %p155 = scmp.lt.s32.totalorder %s154, 7
        %s156 = scalar_select %p155, %s154, 7
        %s157 = smul.addr %s156, 8
        %s158 = scalar_lea.vmem %s2, %s157
        %s159 = smul.u32 4, %s9
      $region28: #{deconv_block_forward.11} parent=15 // pred_fallthru
        _
    $region16: #{deconv_block_forward.11} parent=5 // pred_fallthru
      _
    %p160 = scmp.le.s32.totalorder 1, %s9
    %p161 = scmp.lt.s32.totalorder %s9, 3
    %p162 = pnand %p160, %p161
    %p163 = pneg %p162
    // Predicated region
    $region29: #{deconv_block_forward.11} parent=5 // pred_check
      _
    $region30: #{deconv_block_forward.11} parent=5 // pred_check_branch
      %165 = sbr.rel (%p162) target = $region32
    $region31: #{deconv_block_forward.11} parent=5 // pred_region
      %s166 = ssub.s32 %s9, 1
      %s167 = smul.u32 4, %s14
      %p168 = scmp.lt.s32.totalorder %s167, 7
      %s169 = scalar_select %p168, %s167, 7
      %s170 = smul.addr %s169, 8
      %s171 = smul.addr %s170, 8
      %s172 = scalar_lea.vmem %s0, %s171
      %p173 = pneg %p35
      %p174 = pneg %p32
      %s175 = smul.u32 4, %s14
      %p176 = scmp.lt.s32.totalorder %s175, 7
      %s177 = scalar_select %p176, %s175, 7
      %s178 = smul.addr %s177, 8
      %s179 = scalar_lea.vmem %s1, %s178
      %p180 = pneg %p61
      %p181 = pneg %p58
      %s182 = smul.u32 4, %s14
      %p183 = scmp.lt.s32.totalorder %s182, 7
      %s184 = scalar_select %p183, %s182, 7
      %s185 = smul.addr %s184, 8
      %s186 = scalar_lea.vmem %s2, %s185
      %p187 = pneg %p87
      %p188 = pneg %p84
      %p189 = pneg %p113
      %p190 = pneg %p110
      %s191 = smul.u32 4, %s14
      %p192 = scmp.lt.s32.totalorder %s191, 7
      %s193 = scalar_select %p192, %s191, 7
      %s194 = smul.addr %s193, 8
      %s195 = smul.addr %s194, 8
      %s196 = scalar_lea.vmem %s3, %s195
      %s197 = smul.u32 4, %s14
      %p198 = scmp.lt.s32.totalorder %s197, 7
      %s199 = scalar_select %p198, %s197, 7
      %s200 = smul.addr %s199, 8
      %s201 = smul.addr %s200, 8
      %s202 = scalar_lea.vmem %s0, %s201
      %s203 = smul.u32 4, %s14
      %s204 = smul.u32 4, %s14
      %p205 = scmp.lt.s32.totalorder %s204, 7
      %s206 = scalar_select %p205, %s204, 7
      %s207 = smul.addr %s206, 8
      %s208 = scalar_lea.vmem %s1, %s207
      %s209 = smul.u32 4, %s14
      %s210 = smul.u32 4, %s14
      %p211 = scmp.lt.s32.totalorder %s210, 7
      %s212 = scalar_select %p211, %s210, 7
      %s213 = smul.addr %s212, 8
      %s214 = scalar_lea.vmem %s2, %s213
      %s215 = smul.u32 4, %s14
      %s216 = smul.u32 4, %s14
      %p217 = scmp.lt.s32.totalorder %s216, 7
      %s218 = scalar_select %p217, %s216, 7
      %s219 = smul.addr %s218, 8
      %s220 = smul.addr %s219, 8
      %s221 = scalar_lea.vmem %s3, %s220
      %s222 = smul.u32 4, %s14
      %v223 = vld [vmem:[%s202] sm:$0xff]
      %v224 = vld [vmem:[%s202 + $0x8] sm:$0xff]
      %v225 = vld [vmem:[%s202 + $0x10] sm:$0xff]
      %v226 = vld [vmem:[%s202 + $0x18] sm:$0xff]
      %v227 = vld [vmem:[%s202 + $0x20] sm:$0xff]
      %v228 = vld [vmem:[%s202 + $0x28] sm:$0xff]
      %v229 = vld [vmem:[%s202 + $0x30] sm:$0xff]
      %v230 = vld [vmem:[%s202 + $0x38] sm:$0xff]
      %v231 = vld [vmem:[%s202 + $0x40] sm:$0xff]
      %v232 = vld [vmem:[%s202 + $0x48] sm:$0xff]
      %v233 = vld [vmem:[%s202 + $0x50] sm:$0xff]
      %v234 = vld [vmem:[%s202 + $0x58] sm:$0xff]
      %v235 = vld [vmem:[%s202 + $0x60] sm:$0xff]
      %v236 = vld [vmem:[%s202 + $0x68] sm:$0xff]
      %v237 = vld [vmem:[%s202 + $0x70] sm:$0xff]
      %v238 = vld [vmem:[%s202 + $0x78] sm:$0xff]
      %v239 = vld [vmem:[%s202 + $0x80] sm:$0xff]
      %v240 = vld [vmem:[%s202 + $0x88] sm:$0xff]
      %v241 = vld [vmem:[%s202 + $0x90] sm:$0xff]
      %v242 = vld [vmem:[%s202 + $0x98] sm:$0xff]
      %v243 = vld [vmem:[%s202 + $0xa0] sm:$0xff]
      %v244 = vld [vmem:[%s202 + $0xa8] sm:$0xff]
      %v245 = vld [vmem:[%s202 + $0xb0] sm:$0xff]
      %v246 = vld [vmem:[%s202 + $0xb8] sm:$0xff]
      %v247 = vld [vmem:[%s202 + $0xc0] sm:$0xff]
      %v248 = vld [vmem:[%s202 + $0xc8] sm:$0xff]
      %v249 = vld [vmem:[%s202 + $0xd0] sm:$0xff]
      %v250 = vld [vmem:[%s202 + $0xd8] sm:$0xff]
      %v251 = vld [vmem:[%s202 + $0xe0] sm:$0xff]
      %v252 = vld [vmem:[%s202 + $0xe8] sm:$0xff]
      %v253 = vld [vmem:[%s202 + $0xf0] sm:$0xff]
      %v254 = vld [vmem:[%s202 + $0xf8] sm:$0xff]
      %v255 = vld [vmem:[%s208] sm:$0xff]
      %v256 = vld [vmem:[%s208 + $0x8] sm:$0xff]
      %v257 = vld [vmem:[%s208 + $0x10] sm:$0xff]
      %v258 = vld [vmem:[%s208 + $0x18] sm:$0xff]
      %260 = vset.pattern.permute.xlu0 0
      %261 = vperm.xlu0 %260, %v255
      %v262 = vpop.permute.xlu0 %261
      %265 = vset.pattern.permute.xlu0 0
      %266 = vperm.xlu0 %265, %v256
      %v267 = vpop.permute.xlu0 %266
      %270 = vset.pattern.permute.xlu0 0
      %271 = vperm.xlu0 %270, %v257
      %v272 = vpop.permute.xlu0 %271
      %275 = vset.pattern.permute.xlu0 0
      %276 = vperm.xlu0 %275, %v258
      %v277 = vpop.permute.xlu0 %276
      %v279 = vsub.f32 %v223, %v262
      %v280 = vsub.f32 %v224, %v262
      %v281 = vsub.f32 %v225, %v262
      %v282 = vsub.f32 %v226, %v262
      %v283 = vsub.f32 %v227, %v262
      %v284 = vsub.f32 %v228, %v262
      %v285 = vsub.f32 %v229, %v262
      %v286 = vsub.f32 %v230, %v262
      %v287 = vsub.f32 %v231, %v267
      %v288 = vsub.f32 %v232, %v267
      %v289 = vsub.f32 %v233, %v267
      %v290 = vsub.f32 %v234, %v267
      %v291 = vsub.f32 %v235, %v267
      %v292 = vsub.f32 %v236, %v267
      %v293 = vsub.f32 %v237, %v267
      %v294 = vsub.f32 %v238, %v267
      %v295 = vsub.f32 %v239, %v272
      %v296 = vsub.f32 %v240, %v272
      %v297 = vsub.f32 %v241, %v272
      %v298 = vsub.f32 %v242, %v272
      %v299 = vsub.f32 %v243, %v272
      %v300 = vsub.f32 %v244, %v272
      %v301 = vsub.f32 %v245, %v272
      %v302 = vsub.f32 %v246, %v272
      %v303 = vsub.f32 %v247, %v277
      %v304 = vsub.f32 %v248, %v277
      %v305 = vsub.f32 %v249, %v277
      %v306 = vsub.f32 %v250, %v277
      %v307 = vsub.f32 %v251, %v277
      %v308 = vsub.f32 %v252, %v277
      %v309 = vsub.f32 %v253, %v277
      %v310 = vsub.f32 %v254, %v277
      %v311 = vld [vmem:[%s214] sm:$0xff]
      %v312 = vld [vmem:[%s214 + $0x8] sm:$0xff]
      %v313 = vld [vmem:[%s214 + $0x10] sm:$0xff]
      %v314 = vld [vmem:[%s214 + $0x18] sm:$0xff]
      %316 = vset.pattern.permute.xlu0 0
      %317 = vperm.xlu0 %316, %v311
      %v318 = vpop.permute.xlu0 %317
      %321 = vset.pattern.permute.xlu0 0
      %322 = vperm.xlu0 %321, %v312
      %v323 = vpop.permute.xlu0 %322
      %326 = vset.pattern.permute.xlu0 0
      %327 = vperm.xlu0 %326, %v313
      %v328 = vpop.permute.xlu0 %327
      %331 = vset.pattern.permute.xlu0 0
      %332 = vperm.xlu0 %331, %v314
      %v333 = vpop.permute.xlu0 %332
      %v335 = vmul.f32 %v279, %v318
      %v336 = vmul.f32 %v280, %v318
      %v337 = vmul.f32 %v281, %v318
      %v338 = vmul.f32 %v282, %v318
      %v339 = vmul.f32 %v283, %v318
      %v340 = vmul.f32 %v284, %v318
      %v341 = vmul.f32 %v285, %v318
      %v342 = vmul.f32 %v286, %v318
      %v343 = vmul.f32 %v287, %v323
      %v344 = vmul.f32 %v288, %v323
      %v345 = vmul.f32 %v289, %v323
      %v346 = vmul.f32 %v290, %v323
      %v347 = vmul.f32 %v291, %v323
      %v348 = vmul.f32 %v292, %v323
      %v349 = vmul.f32 %v293, %v323
      %v350 = vmul.f32 %v294, %v323
      %v351 = vmul.f32 %v295, %v328
      %v352 = vmul.f32 %v296, %v328
      %v353 = vmul.f32 %v297, %v328
      %v354 = vmul.f32 %v298, %v328
      %v355 = vmul.f32 %v299, %v328
      %v356 = vmul.f32 %v300, %v328
      %v357 = vmul.f32 %v301, %v328
      %v358 = vmul.f32 %v302, %v328
      %v359 = vmul.f32 %v303, %v333
      %v360 = vmul.f32 %v304, %v333
      %v361 = vmul.f32 %v305, %v333
      %v362 = vmul.f32 %v306, %v333
      %v363 = vmul.f32 %v307, %v333
      %v364 = vmul.f32 %v308, %v333
      %v365 = vmul.f32 %v309, %v333
      %v366 = vmul.f32 %v310, %v333
      %vm367 = vcmp.gt.f32.partialorder %v335, 0.0
      %vm368 = vcmp.gt.f32.partialorder %v336, 0.0
      %vm369 = vcmp.gt.f32.partialorder %v337, 0.0
      %vm370 = vcmp.gt.f32.partialorder %v338, 0.0
      %vm371 = vcmp.gt.f32.partialorder %v339, 0.0
      %vm372 = vcmp.gt.f32.partialorder %v340, 0.0
      %vm373 = vcmp.gt.f32.partialorder %v341, 0.0
      %vm374 = vcmp.gt.f32.partialorder %v342, 0.0
      %vm375 = vcmp.gt.f32.partialorder %v343, 0.0
      %vm376 = vcmp.gt.f32.partialorder %v344, 0.0
      %vm377 = vcmp.gt.f32.partialorder %v345, 0.0
      %vm378 = vcmp.gt.f32.partialorder %v346, 0.0
      %vm379 = vcmp.gt.f32.partialorder %v347, 0.0
      %vm380 = vcmp.gt.f32.partialorder %v348, 0.0
      %vm381 = vcmp.gt.f32.partialorder %v349, 0.0
      %vm382 = vcmp.gt.f32.partialorder %v350, 0.0
      %vm383 = vcmp.gt.f32.partialorder %v351, 0.0
      %vm384 = vcmp.gt.f32.partialorder %v352, 0.0
      %vm385 = vcmp.gt.f32.partialorder %v353, 0.0
      %vm386 = vcmp.gt.f32.partialorder %v354, 0.0
      %vm387 = vcmp.gt.f32.partialorder %v355, 0.0
      %vm388 = vcmp.gt.f32.partialorder %v356, 0.0
      %vm389 = vcmp.gt.f32.partialorder %v357, 0.0
      %vm390 = vcmp.gt.f32.partialorder %v358, 0.0
      %vm391 = vcmp.gt.f32.partialorder %v359, 0.0
      %vm392 = vcmp.gt.f32.partialorder %v360, 0.0
      %vm393 = vcmp.gt.f32.partialorder %v361, 0.0
      %vm394 = vcmp.gt.f32.partialorder %v362, 0.0
      %vm395 = vcmp.gt.f32.partialorder %v363, 0.0
      %vm396 = vcmp.gt.f32.partialorder %v364, 0.0
      %vm397 = vcmp.gt.f32.partialorder %v365, 0.0
      %vm398 = vcmp.gt.f32.partialorder %v366, 0.0
      %v399 = vmul.f32 %v335, 0.2
      %v400 = vmul.f32 %v336, 0.2
      %v401 = vmul.f32 %v337, 0.2
      %v402 = vmul.f32 %v338, 0.2
      %v403 = vmul.f32 %v339, 0.2
      %v404 = vmul.f32 %v340, 0.2
      %v405 = vmul.f32 %v341, 0.2
      %v406 = vmul.f32 %v342, 0.2
      %v407 = vmul.f32 %v343, 0.2
      %v408 = vmul.f32 %v344, 0.2
      %v409 = vmul.f32 %v345, 0.2
      %v410 = vmul.f32 %v346, 0.2
      %v411 = vmul.f32 %v347, 0.2
      %v412 = vmul.f32 %v348, 0.2
      %v413 = vmul.f32 %v349, 0.2
      %v414 = vmul.f32 %v350, 0.2
      %v415 = vmul.f32 %v351, 0.2
      %v416 = vmul.f32 %v352, 0.2
      %v417 = vmul.f32 %v353, 0.2
      %v418 = vmul.f32 %v354, 0.2
      %v419 = vmul.f32 %v355, 0.2
      %v420 = vmul.f32 %v356, 0.2
      %v421 = vmul.f32 %v357, 0.2
      %v422 = vmul.f32 %v358, 0.2
      %v423 = vmul.f32 %v359, 0.2
      %v424 = vmul.f32 %v360, 0.2
      %v425 = vmul.f32 %v361, 0.2
      %v426 = vmul.f32 %v362, 0.2
      %v427 = vmul.f32 %v363, 0.2
      %v428 = vmul.f32 %v364, 0.2
      %v429 = vmul.f32 %v365, 0.2
      %v430 = vmul.f32 %v366, 0.2
      %v431 = vsel %vm367, %v335, %v399
      %v432 = vsel %vm368, %v336, %v400
      %v433 = vsel %vm369, %v337, %v401
      %v434 = vsel %vm370, %v338, %v402
      %v435 = vsel %vm371, %v339, %v403
      %v436 = vsel %vm372, %v340, %v404
      %v437 = vsel %vm373, %v341, %v405
      %v438 = vsel %vm374, %v342, %v406
      %v439 = vsel %vm375, %v343, %v407
      %v440 = vsel %vm376, %v344, %v408
      %v441 = vsel %vm377, %v345, %v409
      %v442 = vsel %vm378, %v346, %v410
      %v443 = vsel %vm379, %v347, %v411
      %v444 = vsel %vm380, %v348, %v412
      %v445 = vsel %vm381, %v349, %v413
      %v446 = vsel %vm382, %v350, %v414
      %v447 = vsel %vm383, %v351, %v415
      %v448 = vsel %vm384, %v352, %v416
      %v449 = vsel %vm385, %v353, %v417
      %v450 = vsel %vm386, %v354, %v418
      %v451 = vsel %vm387, %v355, %v419
      %v452 = vsel %vm388, %v356, %v420
      %v453 = vsel %vm389, %v357, %v421
      %v454 = vsel %vm390, %v358, %v422
      %v455 = vsel %vm391, %v359, %v423
      %v456 = vsel %vm392, %v360, %v424
      %v457 = vsel %vm393, %v361, %v425
      %v458 = vsel %vm394, %v362, %v426
      %v459 = vsel %vm395, %v363, %v427
      %v460 = vsel %vm396, %v364, %v428
      %v461 = vsel %vm397, %v365, %v429
      %v462 = vsel %vm398, %v366, %v430
      %463 = vst [vmem:[%s221] sm:$0xff] %v431
      %464 = vst [vmem:[%s221 + $0x8] sm:$0xff] %v432
      %465 = vst [vmem:[%s221 + $0x10] sm:$0xff] %v433
      %466 = vst [vmem:[%s221 + $0x18] sm:$0xff] %v434
      %467 = vst [vmem:[%s221 + $0x20] sm:$0xff] %v435
      %468 = vst [vmem:[%s221 + $0x28] sm:$0xff] %v436
      %469 = vst [vmem:[%s221 + $0x30] sm:$0xff] %v437
      %470 = vst [vmem:[%s221 + $0x38] sm:$0xff] %v438
      %471 = vst [vmem:[%s221 + $0x40] sm:$0xff] %v439
      %472 = vst [vmem:[%s221 + $0x48] sm:$0xff] %v440
      %473 = vst [vmem:[%s221 + $0x50] sm:$0xff] %v441
      %474 = vst [vmem:[%s221 + $0x58] sm:$0xff] %v442
      %475 = vst [vmem:[%s221 + $0x60] sm:$0xff] %v443
      %476 = vst [vmem:[%s221 + $0x68] sm:$0xff] %v444
      %477 = vst [vmem:[%s221 + $0x70] sm:$0xff] %v445
      %478 = vst [vmem:[%s221 + $0x78] sm:$0xff] %v446
      %479 = vst [vmem:[%s221 + $0x80] sm:$0xff] %v447
      %480 = vst [vmem:[%s221 + $0x88] sm:$0xff] %v448
      %481 = vst [vmem:[%s221 + $0x90] sm:$0xff] %v449
      %482 = vst [vmem:[%s221 + $0x98] sm:$0xff] %v450
      %483 = vst [vmem:[%s221 + $0xa0] sm:$0xff] %v451
      %484 = vst [vmem:[%s221 + $0xa8] sm:$0xff] %v452
      %485 = vst [vmem:[%s221 + $0xb0] sm:$0xff] %v453
      %486 = vst [vmem:[%s221 + $0xb8] sm:$0xff] %v454
      %487 = vst [vmem:[%s221 + $0xc0] sm:$0xff] %v455
      %488 = vst [vmem:[%s221 + $0xc8] sm:$0xff] %v456
      %489 = vst [vmem:[%s221 + $0xd0] sm:$0xff] %v457
      %490 = vst [vmem:[%s221 + $0xd8] sm:$0xff] %v458
      %491 = vst [vmem:[%s221 + $0xe0] sm:$0xff] %v459
      %492 = vst [vmem:[%s221 + $0xe8] sm:$0xff] %v460
      %493 = vst [vmem:[%s221 + $0xf0] sm:$0xff] %v461
      %494 = vst [vmem:[%s221 + $0xf8] sm:$0xff] %v462
      %s495 = smul.u32 4, %s14
      %p496 = scmp.lt.s32.totalorder %s495, 7
      %s497 = scalar_select %p496, %s495, 7
      %s498 = smul.addr %s497, 8
      %s499 = smul.addr %s498, 8
      %s500 = scalar_lea.vmem %s3, %s499
      // Predicated region
      $region33: #{deconv_block_forward.11} parent=31 // pred_check
        %p501 = pneg %p110
      $region34: #{deconv_block_forward.11} parent=31 // pred_check_branch
        %503 = sbr.rel (%p501) target = $region36
      $region35: #{deconv_block_forward.11} parent=31 // pred_region
        %s504 = smul.u32 4, %s14
      $region36: #{deconv_block_forward.11} parent=31 // pred_fallthru
        _
    $region32: #{deconv_block_forward.11} parent=5 // pred_fallthru
      _
    %p505 = scmp.le.s32.totalorder 2, %s9
    // Predicated region
    $region37: #{deconv_block_forward.11} parent=5 // pred_check
      %p506 = pneg %p505
    $region38: #{deconv_block_forward.11} parent=5 // pred_check_branch
      %508 = sbr.rel (%p506) target = $region40
    $region39: #{deconv_block_forward.11} parent=5 // pred_region
      %s509 = ssub.s32 %s9, 2
      // Predicated region
      $region41: #{deconv_block_forward.11} parent=39 // pred_check
        %p510 = pneg %p116
      $region42: #{deconv_block_forward.11} parent=39 // pred_check_branch
        %512 = sbr.rel (%p510) target = $region44
      $region43: #{deconv_block_forward.11} parent=39 // pred_region
        %s513 = smul.u32 4, %s15
        %p514 = scmp.lt.s32.totalorder %s513, 7
        %s515 = scalar_select %p514, %s513, 7
        %s516 = smul.addr %s515, 8
        %s517 = smul.addr %s516, 8
        %s518 = scalar_lea.vmem %s3, %s517
      $region44: #{deconv_block_forward.11} parent=39 // pred_fallthru
        _
    $region40: #{deconv_block_forward.11} parent=5 // pred_fallthru
      _
  $region6: #{deconv_block_forward.11} parent=0 // loop_footer
    %s13 = sadd.s32 1, %s9
  $region7: #{deconv_block_forward.11} parent=0 // loop_footer_branch
    %8 = sbr.rel target = $region3
  $region8: #{deconv_block_forward.11} parent=0 // loop_exit
    _

</llo_original>
